<compile_context>
chip_gen: v6e
topology: v6e:2x2x1
jax: 0.10.0
libtpu: 0.0.40
codegen_flags: <defaults>
</compile_context>

<pallas_src>
import jax
import jax.numpy as jnp
from jax.experimental import pallas as pl
from jax.experimental.pallas import tpu as pltpu

# Logical model sizes (input_size comes from dataset.x_data.shape[1]; use a
# small option-pricing-like feature count for this synthetic script).
INPUT_SIZE = 7
HIDDEN = 120          # hidden_size1 == hidden_size2 == hidden_size3 == 120
OUTPUT_SIZE = 1

# Padded sizes used inside the kernel (exact zero-padding, see note above).
IN_PAD = 8
HID_PAD = 128

NEG_SLOPE = 0.01      # nn.LeakyReLU() default


def _leaky_relu(v):
    return jnp.where(v > 0, v, NEG_SLOPE * v)


def mlp_kernel(x_ref,
               w1_ref, b1_ref,
               w2_ref, b2_ref,
               w3_ref, b3_ref,
               w4_ref, b4_ref,
               out_ref):
    """Fused 4-layer MLP for one batch tile.

    x_ref:   (TB, IN_PAD)                f32
    w1..w3:  [in, out] zero-padded       f32
    b1..b3:  (1, HID_PAD)                f32
    w4:      (1, HID_PAD)  [out, in]     f32 (PyTorch orientation, zero-padded)
    b4:      (1, 1)                      f32
    out_ref: (1, 1, TB)                  f32 (lane-dense output row)
    """
    x = x_ref[...]

    h1 = _leaky_relu(
        jnp.dot(x, w1_ref[...], preferred_element_type=jnp.float32) + b1_ref[...])
    h2 = _leaky_relu(
        jnp.dot(h1, w2_ref[...], preferred_element_type=jnp.float32) + b2_ref[...])
    h3 = _leaky_relu(
        jnp.dot(h2, w3_ref[...], preferred_element_type=jnp.float32) + b3_ref[...])

    # Final layer in transposed orientation: (1, H) @ (H, TB) -> (1, TB) so the
    # 1-wide output is produced lane-dense (no (TB, 1) masked column stores).
    s4 = jnp.dot(w4_ref[...], h3.T, preferred_element_type=jnp.float32)   # (1, TB)
    h4 = _leaky_relu(s4 + b4_ref[...])                                    # (1, TB)

    out_ref[...] = h4.reshape(out_ref.shape).astype(out_ref.dtype)


def _pad_to(a, shape):
    pads = [(0, s - d) for d, s in zip(a.shape, shape)]
    return jnp.pad(a, pads)


def pad_params(params):
    """Zero-pad logical params to the kernel's 8/128-friendly shapes.

    Incoming params follow the reference layout: weights pre-transposed to
    [in, out] (PyTorch nn.Linear stores [out, in]), biases (1, out).
    """
    return dict(
        w1=_pad_to(params["w1"], (IN_PAD, HID_PAD)),
        b1=_pad_to(params["b1"], (1, HID_PAD)),
        w2=_pad_to(params["w2"], (HID_PAD, HID_PAD)),
        b2=_pad_to(params["b2"], (1, HID_PAD)),
        w3=_pad_to(params["w3"], (HID_PAD, HID_PAD)),
        b3=_pad_to(params["b3"], (1, HID_PAD)),
        # Final layer is used in [out, in] orientation inside the kernel.
        w4=_pad_to(params["w4"].T, (OUTPUT_SIZE, HID_PAD)),
        b4=params["b4"].reshape(OUTPUT_SIZE, OUTPUT_SIZE),
    )


def neural_net_forward(x, padded_params, *, batch_tile=256):
    """x: (B, INPUT_SIZE) f32. padded_params: output of pad_params()."""
    B, in_dim = x.shape
    assert in_dim == INPUT_SIZE

    # Pad features to IN_PAD and batch up to a multiple of batch_tile.
    n_tiles = pl.cdiv(B, batch_tile)
    Bp = n_tiles * batch_tile
    xp = jnp.pad(x, ((0, Bp - B), (0, IN_PAD - in_dim)))

    p = padded_params
    w1, b1 = p["w1"], p["b1"]
    w2, b2 = p["w2"], p["b2"]
    w3, b3 = p["w3"], p["b3"]
    w4, b4 = p["w4"], p["b4"]

    def full_spec(arr):
        # Resident weights/biases: the same (only) block every grid step.
        return pl.BlockSpec(arr.shape, lambda i: (0, 0))

    flops = 2 * B * (INPUT_SIZE * HIDDEN + 2 * HIDDEN * HIDDEN
                     + HIDDEN * OUTPUT_SIZE)
    weight_bytes = 4 * (IN_PAD * HID_PAD + 2 * HID_PAD * HID_PAD + HID_PAD
                        + 3 * HID_PAD + 1)
    bytes_accessed = 4 * Bp * (IN_PAD + OUTPUT_SIZE) + weight_bytes

    out3 = pl.pallas_call(
        mlp_kernel,
        out_shape=jax.ShapeDtypeStruct((n_tiles, 1, batch_tile), jnp.float32),
        grid_spec=pltpu.PrefetchScalarGridSpec(
            num_scalar_prefetch=0,
            grid=(n_tiles,),
            in_specs=[
                pl.BlockSpec((batch_tile, IN_PAD), lambda i: (i, 0)),   # x tile
                full_spec(w1), full_spec(b1),
                full_spec(w2), full_spec(b2),
                full_spec(w3), full_spec(b3),
                full_spec(w4), full_spec(b4),
            ],
            out_specs=pl.BlockSpec((1, 1, batch_tile), lambda i: (i, 0, 0)),
        ),
        compiler_params=pltpu.CompilerParams(
            dimension_semantics=("parallel",)),
        cost_estimate=pl.CostEstimate(
            flops=flops, transcendentals=0, bytes_accessed=bytes_accessed),
    )(xp, w1, b1, w2, b2, w3, b3, w4, b4)

    # (n_tiles, 1, batch_tile) -> (Bp, 1) -> (B, 1)
    return out3.reshape(Bp, OUTPUT_SIZE)[:B]


def init_params(key):
    """Deterministic init mirroring nn.Linear default: U(-1/sqrt(fan_in), +)."""
    def linear(key, fan_in, fan_out):
        kw, kb = jax.random.split(key)
        bound = 1.0 / jnp.sqrt(fan_in)
        # Stored already transposed to [in, out] (logical, unpadded).
        w = jax.random.uniform(kw, (fan_in, fan_out), jnp.float32, -bound, bound)
        b = jax.random.uniform(kb, (1, fan_out), jnp.float32, -bound, bound)
        return w, b

    k1, k2, k3, k4 = jax.random.split(key, 4)
    w1, b1 = linear(k1, INPUT_SIZE, HIDDEN)
    w2, b2 = linear(k2, HIDDEN, HIDDEN)
    w3, b3 = linear(k3, HIDDEN, HIDDEN)
    w4, b4 = linear(k4, HIDDEN, OUTPUT_SIZE)
    return dict(w1=w1, b1=b1, w2=w2, b2=b2, w3=w3, b3=b3, w4=w4, b4=b4)


def reference_forward(x, params):
    """Pure-JAX reference of the PyTorch forward (unpadded), for sanity check."""
    h = x
    for wi, bi in (("w1", "b1"), ("w2", "b2"), ("w3", "b3"), ("w4", "b4")):
        h = _leaky_relu(h @ params[wi] + params[bi])
    return h


if __name__ == "__main__":
    key = jax.random.PRNGKey(0)
    kx, kp = jax.random.split(key)

    B = 1024  # 4 grid steps of 256 rows -> both v7x TensorCores get work
    x = jax.random.normal(kx, (B, INPUT_SIZE), dtype=jnp.float32)
    params = init_params(kp)
    padded = pad_params(params)

    out = neural_net_forward(x, padded, batch_tile=256)
    out = jax.block_until_ready(out)

    ref = reference_forward(x, params)
    assert out.shape == (B, OUTPUT_SIZE)
    assert jnp.allclose(out, ref, atol=1e-4, rtol=1e-4)

    print("KERNEL_OK")
</pallas_src>

<mosaic_0001>
module attributes {stable_mosaic.version = 11 : i64} {
  func.func @mlp_kernel(%arg0: i32, %arg1: memref<256x8xf32, #tpu.memory_space<vmem>>, %arg2: memref<8x128xf32, #tpu.memory_space<vmem>>, %arg3: memref<1x128xf32, #tpu.memory_space<vmem>>, %arg4: memref<128x128xf32, #tpu.memory_space<vmem>>, %arg5: memref<1x128xf32, #tpu.memory_space<vmem>>, %arg6: memref<128x128xf32, #tpu.memory_space<vmem>>, %arg7: memref<1x128xf32, #tpu.memory_space<vmem>>, %arg8: memref<1x128xf32, #tpu.memory_space<vmem>>, %arg9: memref<1x1xf32, #tpu.memory_space<vmem>>, %arg10: memref<1x1x256xf32, #tpu.memory_space<vmem>>) attributes {dimension_semantics = [#tpu.dimension_semantics<parallel>], iteration_bounds = array<i64: 4>, scalar_prefetch = 0 : i64, scratch_operands = 0 : i64, tpu.core_type = #tpu.core_type<tc>, window_params = [{transform_indices = @transform_0, window_bounds = array<i64: 256, 8>}, {pipeline_mode = #tpu.pipeline_mode<synchronous>, transform_indices = @transform_1, window_bounds = array<i64: 8, 128>}, {pipeline_mode = #tpu.pipeline_mode<synchronous>, transform_indices = @transform_2, window_bounds = array<i64: 1, 128>}, {pipeline_mode = #tpu.pipeline_mode<synchronous>, transform_indices = @transform_3, window_bounds = array<i64: 128, 128>}, {pipeline_mode = #tpu.pipeline_mode<synchronous>, transform_indices = @transform_4, window_bounds = array<i64: 1, 128>}, {pipeline_mode = #tpu.pipeline_mode<synchronous>, transform_indices = @transform_5, window_bounds = array<i64: 128, 128>}, {pipeline_mode = #tpu.pipeline_mode<synchronous>, transform_indices = @transform_6, window_bounds = array<i64: 1, 128>}, {pipeline_mode = #tpu.pipeline_mode<synchronous>, transform_indices = @transform_7, window_bounds = array<i64: 1, 128>}, {pipeline_mode = #tpu.pipeline_mode<synchronous>, transform_indices = @transform_8, window_bounds = array<i64: 1, 1>}, {transform_indices = @transform_9, window_bounds = array<i64: 1, 1, 256>}]} {
    %c0 = arith.constant 0 : index
    %c0_0 = arith.constant 0 : index
    %0 = vector.load %arg1[%c0, %c0_0] : memref<256x8xf32, #tpu.memory_space<vmem>>, vector<256x8xf32>
    %c0_1 = arith.constant 0 : index
    %c0_2 = arith.constant 0 : index
    %1 = vector.load %arg2[%c0_1, %c0_2] : memref<8x128xf32, #tpu.memory_space<vmem>>, vector<8x128xf32>
    %cst = arith.constant dense<0.000000e+00> : vector<256x128xf32>
    %2 = tpu.matmul %0, %1, %cst {dimension_numbers = #tpu.dot_dimension_numbers<[1], [0], [0], [1], [0, 0, 1, 1], [], []>} : vector<256x8xf32>, vector<8x128xf32>, vector<256x128xf32> -> vector<256x128xf32>
    %c0_3 = arith.constant 0 : index
    %c0_4 = arith.constant 0 : index
    %3 = vector.load %arg3[%c0_3, %c0_4] : memref<1x128xf32, #tpu.memory_space<vmem>>, vector<1x128xf32>
    %4 = vector.broadcast %3 : vector<1x128xf32> to vector<256x128xf32>
    %5 = arith.addf %2, %4 : vector<256x128xf32>
    %cst_5 = arith.constant 0.000000e+00 : f32
    %6 = vector.broadcast %cst_5 : f32 to vector<256x128xf32>
    %7 = arith.cmpf ogt, %5, %6 : vector<256x128xf32>
    %cst_6 = arith.constant 0.00999999977 : f32
    %8 = vector.broadcast %cst_6 : f32 to vector<256x128xf32>
    %9 = arith.mulf %8, %5 : vector<256x128xf32>
    %10 = arith.select %7, %5, %9 : vector<256x128xi1>, vector<256x128xf32>
    %c0_7 = arith.constant 0 : index
    %c0_8 = arith.constant 0 : index
    %11 = vector.load %arg4[%c0_7, %c0_8] : memref<128x128xf32, #tpu.memory_space<vmem>>, vector<128x128xf32>
    %cst_9 = arith.constant dense<0.000000e+00> : vector<256x128xf32>
    %12 = tpu.matmul %10, %11, %cst_9 {dimension_numbers = #tpu.dot_dimension_numbers<[1], [0], [0], [1], [0, 0, 1, 1], [], []>} : vector<256x128xf32>, vector<128x128xf32>, vector<256x128xf32> -> vector<256x128xf32>
    %c0_10 = arith.constant 0 : index
    %c0_11 = arith.constant 0 : index
    %13 = vector.load %arg5[%c0_10, %c0_11] : memref<1x128xf32, #tpu.memory_space<vmem>>, vector<1x128xf32>
    %14 = vector.broadcast %13 : vector<1x128xf32> to vector<256x128xf32>
    %15 = arith.addf %12, %14 : vector<256x128xf32>
    %cst_12 = arith.constant 0.000000e+00 : f32
    %16 = vector.broadcast %cst_12 : f32 to vector<256x128xf32>
    %17 = arith.cmpf ogt, %15, %16 : vector<256x128xf32>
    %cst_13 = arith.constant 0.00999999977 : f32
    %18 = vector.broadcast %cst_13 : f32 to vector<256x128xf32>
    %19 = arith.mulf %18, %15 : vector<256x128xf32>
    %20 = arith.select %17, %15, %19 : vector<256x128xi1>, vector<256x128xf32>
    %c0_14 = arith.constant 0 : index
    %c0_15 = arith.constant 0 : index
    %21 = vector.load %arg6[%c0_14, %c0_15] : memref<128x128xf32, #tpu.memory_space<vmem>>, vector<128x128xf32>
    %cst_16 = arith.constant dense<0.000000e+00> : vector<256x128xf32>
    %22 = tpu.matmul %20, %21, %cst_16 {dimension_numbers = #tpu.dot_dimension_numbers<[1], [0], [0], [1], [0, 0, 1, 1], [], []>} : vector<256x128xf32>, vector<128x128xf32>, vector<256x128xf32> -> vector<256x128xf32>
    %c0_17 = arith.constant 0 : index
    %c0_18 = arith.constant 0 : index
    %23 = vector.load %arg7[%c0_17, %c0_18] : memref<1x128xf32, #tpu.memory_space<vmem>>, vector<1x128xf32>
    %24 = vector.broadcast %23 : vector<1x128xf32> to vector<256x128xf32>
    %25 = arith.addf %22, %24 : vector<256x128xf32>
    %cst_19 = arith.constant 0.000000e+00 : f32
    %26 = vector.broadcast %cst_19 : f32 to vector<256x128xf32>
    %27 = arith.cmpf ogt, %25, %26 : vector<256x128xf32>
    %cst_20 = arith.constant 0.00999999977 : f32
    %28 = vector.broadcast %cst_20 : f32 to vector<256x128xf32>
    %29 = arith.mulf %28, %25 : vector<256x128xf32>
    %30 = arith.select %27, %25, %29 : vector<256x128xi1>, vector<256x128xf32>
    %c0_21 = arith.constant 0 : index
    %c0_22 = arith.constant 0 : index
    %31 = vector.load %arg8[%c0_21, %c0_22] : memref<1x128xf32, #tpu.memory_space<vmem>>, vector<1x128xf32>
    %32 = tpu.transpose %30, [1, 0] : vector<256x128xf32> -> vector<128x256xf32>
    %cst_23 = arith.constant dense<0.000000e+00> : vector<1x256xf32>
    %33 = tpu.matmul %31, %32, %cst_23 {dimension_numbers = #tpu.dot_dimension_numbers<[1], [0], [0], [1], [0, 0, 1, 1], [], []>} : vector<1x128xf32>, vector<128x256xf32>, vector<1x256xf32> -> vector<1x256xf32>
    %c0_24 = arith.constant 0 : index
    %c0_25 = arith.constant 0 : index
    %34 = vector.load %arg9[%c0_24, %c0_25] : memref<1x1xf32, #tpu.memory_space<vmem>>, vector<1x1xf32>
    %35 = vector.broadcast %34 : vector<1x1xf32> to vector<1x256xf32>
    %36 = arith.addf %33, %35 : vector<1x256xf32>
    %cst_26 = arith.constant 0.000000e+00 : f32
    %37 = vector.broadcast %cst_26 : f32 to vector<1x256xf32>
    %38 = arith.cmpf ogt, %36, %37 : vector<1x256xf32>
    %cst_27 = arith.constant 0.00999999977 : f32
    %39 = vector.broadcast %cst_27 : f32 to vector<1x256xf32>
    %40 = arith.mulf %39, %36 : vector<1x256xf32>
    %41 = arith.select %38, %36, %40 : vector<1x256xi1>, vector<1x256xf32>
    %42 = vector.shape_cast %41 : vector<1x256xf32> to vector<1x1x256xf32>
    %c0_28 = arith.constant 0 : index
    %c0_29 = arith.constant 0 : index
    %c0_30 = arith.constant 0 : index
    %43 = vector.load %arg10[%c0_28, %c0_29, %c0_30] : memref<1x1x256xf32, #tpu.memory_space<vmem>>, vector<1x1x256xf32>
    tpu.vector_store %arg10[%c0_28, %c0_29, %c0_30], %42 {strides = array<i32>} : memref<1x1x256xf32, #tpu.memory_space<vmem>>, vector<1x1x256xf32>,
    return
  }
  func.func @transform_0(%arg0: i32) -> (i32, i32) {
    %c0_i32 = arith.constant 0 : i32
    %c0_i32_0 = arith.constant 0 : i32
    return %arg0, %c0_i32 : i32, i32
  }
  func.func @transform_1(%arg0: i32) -> (i32, i32) {
    %c0_i32 = arith.constant 0 : i32
    %c0_i32_0 = arith.constant 0 : i32
    %c0_i32_1 = arith.constant 0 : i32
    return %c0_i32, %c0_i32_0 : i32, i32
  }
  func.func @transform_2(%arg0: i32) -> (i32, i32) {
    %c0_i32 = arith.constant 0 : i32
    %c0_i32_0 = arith.constant 0 : i32
    %c0_i32_1 = arith.constant 0 : i32
    return %c0_i32, %c0_i32_0 : i32, i32
  }
  func.func @transform_3(%arg0: i32) -> (i32, i32) {
    %c0_i32 = arith.constant 0 : i32
    %c0_i32_0 = arith.constant 0 : i32
    %c0_i32_1 = arith.constant 0 : i32
    return %c0_i32, %c0_i32_0 : i32, i32
  }
  func.func @transform_4(%arg0: i32) -> (i32, i32) {
    %c0_i32 = arith.constant 0 : i32
    %c0_i32_0 = arith.constant 0 : i32
    %c0_i32_1 = arith.constant 0 : i32
    return %c0_i32, %c0_i32_0 : i32, i32
  }
  func.func @transform_5(%arg0: i32) -> (i32, i32) {
    %c0_i32 = arith.constant 0 : i32
    %c0_i32_0 = arith.constant 0 : i32
    %c0_i32_1 = arith.constant 0 : i32
    return %c0_i32, %c0_i32_0 : i32, i32
  }
  func.func @transform_6(%arg0: i32) -> (i32, i32) {
    %c0_i32 = arith.constant 0 : i32
    %c0_i32_0 = arith.constant 0 : i32
    %c0_i32_1 = arith.constant 0 : i32
    return %c0_i32, %c0_i32_0 : i32, i32
  }
  func.func @transform_7(%arg0: i32) -> (i32, i32) {
    %c0_i32 = arith.constant 0 : i32
    %c0_i32_0 = arith.constant 0 : i32
    %c0_i32_1 = arith.constant 0 : i32
    return %c0_i32, %c0_i32_0 : i32, i32
  }
  func.func @transform_8(%arg0: i32) -> (i32, i32) {
    %c0_i32 = arith.constant 0 : i32
    %c0_i32_0 = arith.constant 0 : i32
    %c0_i32_1 = arith.constant 0 : i32
    return %c0_i32, %c0_i32_0 : i32, i32
  }
  func.func @transform_9(%arg0: i32) -> (i32, i32, i32) {
    %c0_i32 = arith.constant 0 : i32
    %c0_i32_0 = arith.constant 0 : i32
    %c0_i32_1 = arith.constant 0 : i32
    return %arg0, %c0_i32, %c0_i32_0 : i32, i32, i32
  }
}

</mosaic_0001>

<llo_original>
// kernel: tpu_custom_call.1
$region0: #{tpu_custom_call.1}
  #allocation0 [shape = 'u32[]', space=smem, size = 0x4, offset = 0x4, fixed_abs, tag = 'smem constant byte address 0x4 - core index']
  #allocation1 [shape = 'u32[144,128]{1,0:T(1,128)}', space=vmem, size = 0x12000, scoped, tag = 'internal scratch']
  #allocation2 [shape = 'f32[1,1]{1,0:T(1,128)S(1)}', space=vmem, size = 0x200, scoped, tag = 'scoped memory for tpu_custom_call.1']
  %s0 = inlined_call_operand.vmem [shape: f32[1024,8], index: 0, kind: input, shape index: {}]
  %s1 = inlined_call_operand.vmem [shape: f32[8,128], index: 1, kind: input, shape index: {}]
  %s2 = inlined_call_operand.vmem [shape: f32[1,128], index: 2, kind: input, shape index: {}]
  %s3 = inlined_call_operand.vmem [shape: f32[128,128], index: 3, kind: input, shape index: {}]
  %s4 = inlined_call_operand.vmem [shape: f32[1,128], index: 4, kind: input, shape index: {}]
  %s5 = inlined_call_operand.vmem [shape: f32[128,128], index: 5, kind: input, shape index: {}]
  %s6 = inlined_call_operand.vmem [shape: f32[1,128], index: 6, kind: input, shape index: {}]
  %s7 = inlined_call_operand.vmem [shape: f32[1,128], index: 7, kind: input, shape index: {}]
  %s8 = inlined_call_operand.<no memory space> [shape: f32[1,1], index: 8, kind: input, shape index: {}]
  %s9 = inlined_call_operand.hbm [shape: f32[4,1,256], index: 9, kind: output, shape index: {}]
  %s10 = sld [smem:[#allocation0]]
  $region69: #{tpu_custom_call.1} parent=0
    _
  %s12 = ssub.s32 1, %s10
  %s13 = scalar_select 0, %s12, %s10
  %v14 = vstv %s8
  %15 = vst [vmem:[#allocation2] sm:$0x1] %v14
  $region1: #{tpu_custom_call.1} parent=0
    #allocation3 [shape = 'u8[2048]{0}', space=vmem, size = 0x800, scoped, tag = 'output window, operand 0']
    #allocation4 [shape = 's32[2]{0}', space=sflag, size = 0x8, scoped, tag = 'scoped memory for tpu_custom_call.1']
    %16 = vsyncpa [#allocation4], 0
    %s17 = scalar_lea.sflag [#allocation4], 1
    %18 = vsyncpa %s17, 0
    loop: start=0, step=1, limit=6
    $region2: #{tpu_custom_call.1} parent=1 // loop_pre_header
      _
    $region3: #{tpu_custom_call.1} parent=1 // loop_header
      %s20 = sphi 0, %s24
      %p21 = scmp.ge.s32.totalorder %s20, 6
      %s30 = sphi 0, %s32
      %s33 = sphi 0, %s30
      %s34 = sphi 0, %s33
      %s50 = sphi 0, %s34
      %s54 = sphi 0, %s54
      %s56 = sphi 0, %s54
      %s57 = sphi 0, %s56
      %s71 = sphi 0, %s57
      %s75 = sphi 0, %s75
      %s77 = sphi 0, %s75
      %s78 = sphi 0, %s77
      %s92 = sphi 0, %s78
      %s96 = sphi 0, %s96
      %s98 = sphi 0, %s96
      %s99 = sphi 0, %s98
      %s113 = sphi 0, %s99
      %s117 = sphi 0, %s117
      %s119 = sphi 0, %s117
      %s120 = sphi 0, %s119
      %s134 = sphi 0, %s120
      %s138 = sphi 0, %s138
      %s140 = sphi 0, %s138
      %s141 = sphi 0, %s140
      %s155 = sphi 0, %s141
      %s159 = sphi 0, %s159
      %s161 = sphi 0, %s159
      %s162 = sphi 0, %s161
      %s176 = sphi 0, %s162
      %s180 = sphi 0, %s180
      %s182 = sphi 0, %s180
      %s183 = sphi 0, %s182
      %s197 = sphi 0, %s183
      %s201 = sphi 0, %s201
      %s203 = sphi 0, %s201
      %s204 = sphi 0, %s203
      %s218 = sphi 0, %s204
      %s224 = sphi 0, %s226
      %s227 = sphi 0, %s224
      %s228 = sphi 0, %s227
      %s244 = sphi 0, %s228
    $region4: #{tpu_custom_call.1} parent=1 // loop_header_branch
      %23 = sbr.rel (%p21) target = $region8
    $region5: #{tpu_custom_call.1} parent=1 // loop_body
      %s25 = ssub.s32 %s20, 1
      %s26 = ssub.s32 %s20, 2
      %s27 = sadd.s32 %s20, 1
      %s28 = ssub.s32 %s20, %s27
      %p29 = scmp.eq.s32.totalorder %s28, 0
      %s31 = sadd.s32 %s30, 1
      %s32 = scalar_select %p29, %s30, %s31
      %p35 = pneg %p29
      %p36 = scmp.eq.s32.totalorder %s20, 3
      %p37 = por %p35, %p36
      %p38 = scmp.ne.s32.totalorder %s30, %s33
      %p39 = scmp.eq.s32.totalorder %s20, 0
      %p40 = por %p38, %p39
      %p41 = scmp.ne.s32.totalorder %s30, %s33
      %p42 = scmp.eq.s32.totalorder %s25, 3
      %p43 = por %p41, %p42
      %p44 = scmp.ne.s32.totalorder %s33, %s34
      %p45 = scmp.eq.s32.totalorder %s25, 0
      %p46 = por %p44, %p45
      %p47 = scmp.ne.s32.totalorder %s33, %s34
      %p48 = scmp.eq.s32.totalorder %s26, 3
      %p49 = por %p47, %p48
      %p51 = scmp.ne.s32.totalorder %s34, %s50
      %p52 = scmp.eq.s32.totalorder %s26, 0
      %p53 = por %p51, %p52
      %s55 = sadd.s32 %s54, 1
      %p58 = scmp.eq.s32.totalorder %s20, 3
      %p59 = scmp.ne.s32.totalorder %s54, %s56
      %p60 = scmp.eq.s32.totalorder %s20, 0
      %p61 = por %p59, %p60
      %p62 = scmp.ne.s32.totalorder %s54, %s56
      %p63 = scmp.eq.s32.totalorder %s25, 3
      %p64 = por %p62, %p63
      %p65 = scmp.ne.s32.totalorder %s56, %s57
      %p66 = scmp.eq.s32.totalorder %s25, 0
      %p67 = por %p65, %p66
      %p68 = scmp.ne.s32.totalorder %s56, %s57
      %p69 = scmp.eq.s32.totalorder %s26, 3
      %p70 = por %p68, %p69
      %p72 = scmp.ne.s32.totalorder %s57, %s71
      %p73 = scmp.eq.s32.totalorder %s26, 0
      %p74 = por %p72, %p73
      %s76 = sadd.s32 %s75, 1
      %p79 = scmp.eq.s32.totalorder %s20, 3
      %p80 = scmp.ne.s32.totalorder %s75, %s77
      %p81 = scmp.eq.s32.totalorder %s20, 0
      %p82 = por %p80, %p81
      %p83 = scmp.ne.s32.totalorder %s75, %s77
      %p84 = scmp.eq.s32.totalorder %s25, 3
      %p85 = por %p83, %p84
      %p86 = scmp.ne.s32.totalorder %s77, %s78
      %p87 = scmp.eq.s32.totalorder %s25, 0
      %p88 = por %p86, %p87
      %p89 = scmp.ne.s32.totalorder %s77, %s78
      %p90 = scmp.eq.s32.totalorder %s26, 3
      %p91 = por %p89, %p90
      %p93 = scmp.ne.s32.totalorder %s78, %s92
      %p94 = scmp.eq.s32.totalorder %s26, 0
      %p95 = por %p93, %p94
      %s97 = sadd.s32 %s96, 1
      %p100 = scmp.eq.s32.totalorder %s20, 3
      %p101 = scmp.ne.s32.totalorder %s96, %s98
      %p102 = scmp.eq.s32.totalorder %s20, 0
      %p103 = por %p101, %p102
      %p104 = scmp.ne.s32.totalorder %s96, %s98
      %p105 = scmp.eq.s32.totalorder %s25, 3
      %p106 = por %p104, %p105
      %p107 = scmp.ne.s32.totalorder %s98, %s99
      %p108 = scmp.eq.s32.totalorder %s25, 0
      %p109 = por %p107, %p108
      %p110 = scmp.ne.s32.totalorder %s98, %s99
      %p111 = scmp.eq.s32.totalorder %s26, 3
      %p112 = por %p110, %p111
      %p114 = scmp.ne.s32.totalorder %s99, %s113
      %p115 = scmp.eq.s32.totalorder %s26, 0
      %p116 = por %p114, %p115
      %s118 = sadd.s32 %s117, 1
      %p121 = scmp.eq.s32.totalorder %s20, 3
      %p122 = scmp.ne.s32.totalorder %s117, %s119
      %p123 = scmp.eq.s32.totalorder %s20, 0
      %p124 = por %p122, %p123
      %p125 = scmp.ne.s32.totalorder %s117, %s119
      %p126 = scmp.eq.s32.totalorder %s25, 3
      %p127 = por %p125, %p126
      %p128 = scmp.ne.s32.totalorder %s119, %s120
      %p129 = scmp.eq.s32.totalorder %s25, 0
      %p130 = por %p128, %p129
      %p131 = scmp.ne.s32.totalorder %s119, %s120
      %p132 = scmp.eq.s32.totalorder %s26, 3
      %p133 = por %p131, %p132
      %p135 = scmp.ne.s32.totalorder %s120, %s134
      %p136 = scmp.eq.s32.totalorder %s26, 0
      %p137 = por %p135, %p136
      %s139 = sadd.s32 %s138, 1
      %p142 = scmp.eq.s32.totalorder %s20, 3
      %p143 = scmp.ne.s32.totalorder %s138, %s140
      %p144 = scmp.eq.s32.totalorder %s20, 0
      %p145 = por %p143, %p144
      %p146 = scmp.ne.s32.totalorder %s138, %s140
      %p147 = scmp.eq.s32.totalorder %s25, 3
      %p148 = por %p146, %p147
      %p149 = scmp.ne.s32.totalorder %s140, %s141
      %p150 = scmp.eq.s32.totalorder %s25, 0
      %p151 = por %p149, %p150
      %p152 = scmp.ne.s32.totalorder %s140, %s141
      %p153 = scmp.eq.s32.totalorder %s26, 3
      %p154 = por %p152, %p153
      %p156 = scmp.ne.s32.totalorder %s141, %s155
      %p157 = scmp.eq.s32.totalorder %s26, 0
      %p158 = por %p156, %p157
      %s160 = sadd.s32 %s159, 1
      %p163 = scmp.eq.s32.totalorder %s20, 3
      %p164 = scmp.ne.s32.totalorder %s159, %s161
      %p165 = scmp.eq.s32.totalorder %s20, 0
      %p166 = por %p164, %p165
      %p167 = scmp.ne.s32.totalorder %s159, %s161
      %p168 = scmp.eq.s32.totalorder %s25, 3
      %p169 = por %p167, %p168
      %p170 = scmp.ne.s32.totalorder %s161, %s162
      %p171 = scmp.eq.s32.totalorder %s25, 0
      %p172 = por %p170, %p171
      %p173 = scmp.ne.s32.totalorder %s161, %s162
      %p174 = scmp.eq.s32.totalorder %s26, 3
      %p175 = por %p173, %p174
      %p177 = scmp.ne.s32.totalorder %s162, %s176
      %p178 = scmp.eq.s32.totalorder %s26, 0
      %p179 = por %p177, %p178
      %s181 = sadd.s32 %s180, 1
      %p184 = scmp.eq.s32.totalorder %s20, 3
      %p185 = scmp.ne.s32.totalorder %s180, %s182
      %p186 = scmp.eq.s32.totalorder %s20, 0
      %p187 = por %p185, %p186
      %p188 = scmp.ne.s32.totalorder %s180, %s182
      %p189 = scmp.eq.s32.totalorder %s25, 3
      %p190 = por %p188, %p189
      %p191 = scmp.ne.s32.totalorder %s182, %s183
      %p192 = scmp.eq.s32.totalorder %s25, 0
      %p193 = por %p191, %p192
      %p194 = scmp.ne.s32.totalorder %s182, %s183
      %p195 = scmp.eq.s32.totalorder %s26, 3
      %p196 = por %p194, %p195
      %p198 = scmp.ne.s32.totalorder %s183, %s197
      %p199 = scmp.eq.s32.totalorder %s26, 0
      %p200 = por %p198, %p199
      %s202 = sadd.s32 %s201, 1
      %p205 = scmp.eq.s32.totalorder %s20, 3
      %p206 = scmp.ne.s32.totalorder %s201, %s203
      %p207 = scmp.eq.s32.totalorder %s20, 0
      %p208 = por %p206, %p207
      %p209 = scmp.ne.s32.totalorder %s201, %s203
      %p210 = scmp.eq.s32.totalorder %s25, 3
      %p211 = por %p209, %p210
      %p212 = scmp.ne.s32.totalorder %s203, %s204
      %p213 = scmp.eq.s32.totalorder %s25, 0
      %p214 = por %p212, %p213
      %p215 = scmp.ne.s32.totalorder %s203, %s204
      %p216 = scmp.eq.s32.totalorder %s26, 3
      %p217 = por %p215, %p216
      %p219 = scmp.ne.s32.totalorder %s204, %s218
      %p220 = scmp.eq.s32.totalorder %s26, 0
      %p221 = por %p219, %p220
      %s222 = ssub.s32 %s20, %s27
      %p223 = scmp.eq.s32.totalorder %s222, 0
      %s225 = sadd.s32 %s224, 1
      %s226 = scalar_select %p223, %s224, %s225
      %p229 = pneg %p223
      %p230 = scmp.eq.s32.totalorder %s20, 3
      %p231 = por %p229, %p230
      %p232 = scmp.ne.s32.totalorder %s224, %s227
      %p233 = scmp.eq.s32.totalorder %s20, 0
      %p234 = por %p232, %p233
      %p235 = scmp.ne.s32.totalorder %s224, %s227
      %p236 = scmp.eq.s32.totalorder %s25, 3
      %p237 = por %p235, %p236
      %p238 = scmp.ne.s32.totalorder %s227, %s228
      %p239 = scmp.eq.s32.totalorder %s25, 0
      %p240 = por %p238, %p239
      %p241 = scmp.ne.s32.totalorder %s227, %s228
      %p242 = scmp.eq.s32.totalorder %s26, 3
      %p243 = por %p241, %p242
      %p245 = scmp.ne.s32.totalorder %s228, %s244
      %p246 = scmp.eq.s32.totalorder %s26, 0
      %p247 = por %p245, %p246
      %p248 = scmp.le.s32.totalorder 1, %s20
      %p249 = scmp.lt.s32.totalorder %s20, 5
      %p250 = pnand %p248, %p249
      %p251 = pneg %p250
      // Predicated region
      $region9: #{tpu_custom_call.1} parent=5 // pred_check
        _
      $region10: #{tpu_custom_call.1} parent=5 // pred_check_branch
        %253 = sbr.rel (%p250) target = $region12
      $region11: #{tpu_custom_call.1} parent=5 // pred_region
        %s254 = ssub.s32 %s20, 1
        // Predicated region
        $region13: #{tpu_custom_call.1} parent=11 // pred_check
          %p255 = pneg %p67
        $region14: #{tpu_custom_call.1} parent=11 // pred_check_branch
          %257 = sbr.rel (%p255) target = $region16
        $region15: #{tpu_custom_call.1} parent=11 // pred_region
          _
        $region16: #{tpu_custom_call.1} parent=11 // pred_fallthru
          _
        // Predicated region
        $region17: #{tpu_custom_call.1} parent=11 // pred_check
          %p258 = pneg %p88
        $region18: #{tpu_custom_call.1} parent=11 // pred_check_branch
          %260 = sbr.rel (%p258) target = $region20
        $region19: #{tpu_custom_call.1} parent=11 // pred_region
          _
        $region20: #{tpu_custom_call.1} parent=11 // pred_fallthru
          _
        // Predicated region
        $region21: #{tpu_custom_call.1} parent=11 // pred_check
          %p261 = pneg %p109
        $region22: #{tpu_custom_call.1} parent=11 // pred_check_branch
          %263 = sbr.rel (%p261) target = $region24
        $region23: #{tpu_custom_call.1} parent=11 // pred_region
          _
        $region24: #{tpu_custom_call.1} parent=11 // pred_fallthru
          _
        // Predicated region
        $region25: #{tpu_custom_call.1} parent=11 // pred_check
          %p264 = pneg %p130
        $region26: #{tpu_custom_call.1} parent=11 // pred_check_branch
          %266 = sbr.rel (%p264) target = $region28
        $region27: #{tpu_custom_call.1} parent=11 // pred_region
          _
        $region28: #{tpu_custom_call.1} parent=11 // pred_fallthru
          _
        // Predicated region
        $region29: #{tpu_custom_call.1} parent=11 // pred_check
          %p267 = pneg %p151
        $region30: #{tpu_custom_call.1} parent=11 // pred_check_branch
          %269 = sbr.rel (%p267) target = $region32
        $region31: #{tpu_custom_call.1} parent=11 // pred_region
          _
        $region32: #{tpu_custom_call.1} parent=11 // pred_fallthru
          _
        // Predicated region
        $region33: #{tpu_custom_call.1} parent=11 // pred_check
          %p270 = pneg %p172
        $region34: #{tpu_custom_call.1} parent=11 // pred_check_branch
          %272 = sbr.rel (%p270) target = $region36
        $region35: #{tpu_custom_call.1} parent=11 // pred_region
          _
        $region36: #{tpu_custom_call.1} parent=11 // pred_fallthru
          _
        // Predicated region
        $region37: #{tpu_custom_call.1} parent=11 // pred_check
          %p273 = pneg %p193
        $region38: #{tpu_custom_call.1} parent=11 // pred_check_branch
          %275 = sbr.rel (%p273) target = $region40
        $region39: #{tpu_custom_call.1} parent=11 // pred_region
          _
        $region40: #{tpu_custom_call.1} parent=11 // pred_fallthru
          _
        // Predicated region
        $region41: #{tpu_custom_call.1} parent=11 // pred_check
          %p276 = pneg %p214
        $region42: #{tpu_custom_call.1} parent=11 // pred_check_branch
          %278 = sbr.rel (%p276) target = $region44
        $region43: #{tpu_custom_call.1} parent=11 // pred_region
          _
        $region44: #{tpu_custom_call.1} parent=11 // pred_fallthru
          _
      $region12: #{tpu_custom_call.1} parent=5 // pred_fallthru
        _
      %p279 = scmp.lt.s32.totalorder %s20, 4
      // Predicated region
      $region45: #{tpu_custom_call.1} parent=5 // pred_check
        %p280 = pneg %p279
      $region46: #{tpu_custom_call.1} parent=5 // pred_check_branch
        %282 = sbr.rel (%p280) target = $region48
      $region47: #{tpu_custom_call.1} parent=5 // pred_region
        // Predicated region
        $region49: #{tpu_custom_call.1} parent=47 // pred_check
          %p283 = pneg %p40
        $region50: #{tpu_custom_call.1} parent=47 // pred_check_branch
          %285 = sbr.rel (%p283) target = $region52
        $region51: #{tpu_custom_call.1} parent=47 // pred_region
          %s286 = smul.u32 32, %s20
          %p287 = scmp.lt.s32.totalorder %s286, 127
          %s288 = scalar_select %p287, %s286, 127
          %s289 = smul.addr %s288, 8
          %s290 = scalar_lea.vmem %s0, %s289
          %s291 = smul.u32 32, %s20
        $region52: #{tpu_custom_call.1} parent=47 // pred_fallthru
          _
      $region48: #{tpu_custom_call.1} parent=5 // pred_fallthru
        _
      %p292 = scmp.le.s32.totalorder 1, %s20
      %p293 = scmp.lt.s32.totalorder %s20, 5
      %p294 = pnand %p292, %p293
      %p295 = pneg %p294
      // Predicated region
      $region53: #{tpu_custom_call.1} parent=5 // pred_check
        _
      $region54: #{tpu_custom_call.1} parent=5 // pred_check_branch
        %297 = sbr.rel (%p294) target = $region56
      $region55: #{tpu_custom_call.1} parent=5 // pred_region
        %s298 = ssub.s32 %s20, 1
        %s299 = smul.u32 32, %s25
        %p300 = scmp.lt.s32.totalorder %s299, 127
        %s301 = scalar_select %p300, %s299, 127
        %s302 = smul.addr %s301, 8
        %s303 = scalar_lea.vmem %s0, %s302
        %p304 = pneg %p46
        %p305 = pneg %p43
        %p306 = pneg %p67
        %p307 = pneg %p64
        %p308 = pneg %p88
        %p309 = pneg %p85
        %p310 = pneg %p109
        %p311 = pneg %p106
        %p312 = pneg %p130
        %p313 = pneg %p127
        %p314 = pneg %p151
        %p315 = pneg %p148
        %p316 = pneg %p172
        %p317 = pneg %p169
        %p318 = pneg %p193
        %p319 = pneg %p190
        %p320 = pneg %p214
        %p321 = pneg %p211
        %p322 = pneg %p240
        %p323 = pneg %p237
        %s324 = sand.u32 %s227, 1
        %s325 = scalar_lea.sflag [#allocation4], %s324
        %s326 = sand.u32 %s227, 1
        %s327 = smul.addr %s326, 2
        %s328 = scalar_lea.vmem [#allocation3], %s327
        %s329 = smul.u32 32, %s25
        %p330 = scmp.lt.s32.totalorder %s329, 127
        %s331 = scalar_select %p330, %s329, 127
        %s332 = smul.addr %s331, 8
        %s333 = scalar_lea.vmem %s0, %s332
        %s334 = smul.u32 32, %s25
        %v335 = vld [vmem:[%s333] sm:$0xff]
        %v336 = vld [vmem:[%s333 + $0x8] sm:$0xff]
        %v337 = vld [vmem:[%s333 + $0x10] sm:$0xff]
        %v338 = vld [vmem:[%s333 + $0x18] sm:$0xff]
        %v339 = vld [vmem:[%s333 + $0x20] sm:$0xff]
        %v340 = vld [vmem:[%s333 + $0x28] sm:$0xff]
        %v341 = vld [vmem:[%s333 + $0x30] sm:$0xff]
        %v342 = vld [vmem:[%s333 + $0x38] sm:$0xff]
        %v343 = vld [vmem:[%s333 + $0x40] sm:$0xff]
        %v344 = vld [vmem:[%s333 + $0x48] sm:$0xff]
        %v345 = vld [vmem:[%s333 + $0x50] sm:$0xff]
        %v346 = vld [vmem:[%s333 + $0x58] sm:$0xff]
        %v347 = vld [vmem:[%s333 + $0x60] sm:$0xff]
        %v348 = vld [vmem:[%s333 + $0x68] sm:$0xff]
        %v349 = vld [vmem:[%s333 + $0x70] sm:$0xff]
        %v350 = vld [vmem:[%s333 + $0x78] sm:$0xff]
        %v351 = vld [vmem:[%s333 + $0x80] sm:$0xff]
        %v352 = vld [vmem:[%s333 + $0x88] sm:$0xff]
        %v353 = vld [vmem:[%s333 + $0x90] sm:$0xff]
        %v354 = vld [vmem:[%s333 + $0x98] sm:$0xff]
        %v355 = vld [vmem:[%s333 + $0xa0] sm:$0xff]
        %v356 = vld [vmem:[%s333 + $0xa8] sm:$0xff]
        %v357 = vld [vmem:[%s333 + $0xb0] sm:$0xff]
        %v358 = vld [vmem:[%s333 + $0xb8] sm:$0xff]
        %v359 = vld [vmem:[%s333 + $0xc0] sm:$0xff]
        %v360 = vld [vmem:[%s333 + $0xc8] sm:$0xff]
        %v361 = vld [vmem:[%s333 + $0xd0] sm:$0xff]
        %v362 = vld [vmem:[%s333 + $0xd8] sm:$0xff]
        %v363 = vld [vmem:[%s333 + $0xe0] sm:$0xff]
        %v364 = vld [vmem:[%s333 + $0xe8] sm:$0xff]
        %v365 = vld [vmem:[%s333 + $0xf0] sm:$0xff]
        %v366 = vld [vmem:[%s333 + $0xf8] sm:$0xff]
        %v367 = vld [vmem:[%s1] sm:$0xff]
        %v368 = vld [vmem:[%s2] sm:$0x1]
        %v370 = vlaneseq
        %v371 = vshrl.u32 %v370, 7
        %v372 = vsub.s32 0, %v371
        %v373 = vrot.slane %v368, %v372
        %vm375 = vcmask 64512
        %v377 = vsel %vm375, %v335, 0
        %v380 = vsel %vm375, %v336, 0
        %v383 = vsel %vm375, %v337, 0
        %v386 = vsel %vm375, %v338, 0
        %v389 = vsel %vm375, %v339, 0
        %v392 = vsel %vm375, %v340, 0
        %v395 = vsel %vm375, %v341, 0
        %v398 = vsel %vm375, %v342, 0
        %v401 = vsel %vm375, %v343, 0
        %v404 = vsel %vm375, %v344, 0
        %v407 = vsel %vm375, %v345, 0
        %v410 = vsel %vm375, %v346, 0
        %v413 = vsel %vm375, %v347, 0
        %v416 = vsel %vm375, %v348, 0
        %v419 = vsel %vm375, %v349, 0
        %v422 = vsel %vm375, %v350, 0
        %v425 = vsel %vm375, %v351, 0
        %v428 = vsel %vm375, %v352, 0
        %v431 = vsel %vm375, %v353, 0
        %v434 = vsel %vm375, %v354, 0
        %v437 = vsel %vm375, %v355, 0
        %v440 = vsel %vm375, %v356, 0
        %v443 = vsel %vm375, %v357, 0
        %v446 = vsel %vm375, %v358, 0
        %v449 = vsel %vm375, %v359, 0
        %v452 = vsel %vm375, %v360, 0
        %v455 = vsel %vm375, %v361, 0
        %v458 = vsel %vm375, %v362, 0
        %v461 = vsel %vm375, %v363, 0
        %v464 = vsel %vm375, %v364, 0
        %v467 = vsel %vm375, %v365, 0
        %v470 = vsel %vm375, %v366, 0
        %472 = vmatprep.subr.mxu0 0.0
        %473 = vmatpush1.msra.mxu0 0.0
        %474 = vmatprep.subr.mxu0 0.0
        %475 = vmatpush1.msra.mxu0 0.0
        %476 = vmatprep.subr.mxu0 0.0
        %477 = vmatpush1.msra.mxu0 0.0
        %478 = vmatprep.subr.mxu0 0.0
        %479 = vmatpush1.msra.mxu0 0.0
        %480 = vmatprep.subr.mxu0 0.0
        %481 = vmatpush1.msra.mxu0 0.0
        %482 = vmatprep.subr.mxu0 0.0
        %483 = vmatpush1.msra.mxu0 0.0
        %484 = vmatprep.subr.mxu0 0.0
        %485 = vmatpush1.msra.mxu0 0.0
        %486 = vmatprep.subr.mxu0 0.0
        %487 = vmatpush1.msra.mxu0 0.0
        %488 = vmatprep.subr.mxu0 0.0
        %489 = vmatpush1.msra.mxu0 0.0
        %490 = vmatprep.subr.mxu0 0.0
        %491 = vmatpush1.msra.mxu0 0.0
        %492 = vmatprep.subr.mxu0 0.0
        %493 = vmatpush1.msra.mxu0 0.0
        %494 = vmatprep.subr.mxu0 0.0
        %495 = vmatpush1.msra.mxu0 0.0
        %496 = vmatprep.subr.mxu0 0.0
        %497 = vmatpush1.msra.mxu0 0.0
        %498 = vmatprep.subr.mxu0 0.0
        %499 = vmatpush1.msra.mxu0 0.0
        %500 = vmatprep.subr.mxu0 0.0
        %501 = vmatpush1.msra.mxu0 0.0
        %502 = vmatprep.subr.mxu0 0.0
        %503 = vmatpush1.msra.mxu0 %v367
        %504 = vmatprep.subr.mxu0 0.0
        %505 = vmatpush2.msra.mxu0 0.0
        %506 = vmatprep.subr.mxu0 0.0
        %507 = vmatpush2.msra.mxu0 0.0
        %508 = vmatprep.subr.mxu0 0.0
        %509 = vmatpush2.msra.mxu0 0.0
        %510 = vmatprep.subr.mxu0 0.0
        %511 = vmatpush2.msra.mxu0 0.0
        %512 = vmatprep.subr.mxu0 0.0
        %513 = vmatpush2.msra.mxu0 0.0
        %514 = vmatprep.subr.mxu0 0.0
        %515 = vmatpush2.msra.mxu0 0.0
        %516 = vmatprep.subr.mxu0 0.0
        %517 = vmatpush2.msra.mxu0 0.0
        %518 = vmatprep.subr.mxu0 0.0
        %519 = vmatpush2.msra.mxu0 0.0
        %520 = vmatprep.subr.mxu0 0.0
        %521 = vmatpush2.msra.mxu0 0.0
        %522 = vmatprep.subr.mxu0 0.0
        %523 = vmatpush2.msra.mxu0 0.0
        %524 = vmatprep.subr.mxu0 0.0
        %525 = vmatpush2.msra.mxu0 0.0
        %526 = vmatprep.subr.mxu0 0.0
        %527 = vmatpush2.msra.mxu0 0.0
        %528 = vmatprep.subr.mxu0 0.0
        %529 = vmatpush2.msra.mxu0 0.0
        %530 = vmatprep.subr.mxu0 0.0
        %531 = vmatpush2.msra.mxu0 0.0
        %532 = vmatprep.subr.mxu0 0.0
        %533 = vmatpush2.msra.mxu0 0.0
        %534 = vmatprep.subr.mxu0 0.0
        %535 = vmatpush2.msra.mxu0 0.0
        %536 = vmatprep.mubr.f32.mxu0 0.0
        %537 = vmatmul.mubr.f32.gmra.mxu0 %v377
        %v538 = vpop.f32.mrf.mxu0
        %v539 = vadd.f32 %v373, %v538
        %v540 = vpop.f32.mrf.mxu0
        %541 = vmatprep.mubr.f32.mxu0 0.0
        %542 = vmatmul.mubr.f32.gmra.mxu0 %v380
        %v543 = vpop.f32.mrf.mxu0
        %v544 = vadd.f32 %v373, %v543
        %v545 = vpop.f32.mrf.mxu0
        %546 = vmatprep.mubr.f32.mxu0 0.0
        %547 = vmatmul.mubr.f32.gmra.mxu0 %v383
        %v548 = vpop.f32.mrf.mxu0
        %v549 = vadd.f32 %v373, %v548
        %v550 = vpop.f32.mrf.mxu0
        %551 = vmatprep.mubr.f32.mxu0 0.0
        %552 = vmatmul.mubr.f32.gmra.mxu0 %v386
        %v553 = vpop.f32.mrf.mxu0
        %v554 = vadd.f32 %v373, %v553
        %v555 = vpop.f32.mrf.mxu0
        %556 = vmatprep.mubr.f32.mxu0 0.0
        %557 = vmatmul.mubr.f32.gmra.mxu0 %v389
        %v558 = vpop.f32.mrf.mxu0
        %v559 = vadd.f32 %v373, %v558
        %v560 = vpop.f32.mrf.mxu0
        %561 = vmatprep.mubr.f32.mxu0 0.0
        %562 = vmatmul.mubr.f32.gmra.mxu0 %v392
        %v563 = vpop.f32.mrf.mxu0
        %v564 = vadd.f32 %v373, %v563
        %v565 = vpop.f32.mrf.mxu0
        %566 = vmatprep.mubr.f32.mxu0 0.0
        %567 = vmatmul.mubr.f32.gmra.mxu0 %v395
        %v568 = vpop.f32.mrf.mxu0
        %v569 = vadd.f32 %v373, %v568
        %v570 = vpop.f32.mrf.mxu0
        %571 = vmatprep.mubr.f32.mxu0 0.0
        %572 = vmatmul.mubr.f32.gmra.mxu0 %v398
        %v573 = vpop.f32.mrf.mxu0
        %v574 = vadd.f32 %v373, %v573
        %v575 = vpop.f32.mrf.mxu0
        %576 = vmatprep.mubr.f32.mxu0 0.0
        %577 = vmatmul.mubr.f32.gmra.mxu0 %v401
        %v578 = vpop.f32.mrf.mxu0
        %v579 = vadd.f32 %v373, %v578
        %v580 = vpop.f32.mrf.mxu0
        %581 = vmatprep.mubr.f32.mxu0 0.0
        %582 = vmatmul.mubr.f32.gmra.mxu0 %v404
        %v583 = vpop.f32.mrf.mxu0
        %v584 = vadd.f32 %v373, %v583
        %v585 = vpop.f32.mrf.mxu0
        %586 = vmatprep.mubr.f32.mxu0 0.0
        %587 = vmatmul.mubr.f32.gmra.mxu0 %v407
        %v588 = vpop.f32.mrf.mxu0
        %v589 = vadd.f32 %v373, %v588
        %v590 = vpop.f32.mrf.mxu0
        %591 = vmatprep.mubr.f32.mxu0 0.0
        %592 = vmatmul.mubr.f32.gmra.mxu0 %v410
        %v593 = vpop.f32.mrf.mxu0
        %v594 = vadd.f32 %v373, %v593
        %v595 = vpop.f32.mrf.mxu0
        %596 = vmatprep.mubr.f32.mxu0 0.0
        %597 = vmatmul.mubr.f32.gmra.mxu0 %v413
        %v598 = vpop.f32.mrf.mxu0
        %v599 = vadd.f32 %v373, %v598
        %v600 = vpop.f32.mrf.mxu0
        %601 = vmatprep.mubr.f32.mxu0 0.0
        %602 = vmatmul.mubr.f32.gmra.mxu0 %v416
        %v603 = vpop.f32.mrf.mxu0
        %v604 = vadd.f32 %v373, %v603
        %v605 = vpop.f32.mrf.mxu0
        %606 = vmatprep.mubr.f32.mxu0 0.0
        %607 = vmatmul.mubr.f32.gmra.mxu0 %v419
        %v608 = vpop.f32.mrf.mxu0
        %v609 = vadd.f32 %v373, %v608
        %v610 = vpop.f32.mrf.mxu0
        %611 = vmatprep.mubr.f32.mxu0 0.0
        %612 = vmatmul.mubr.f32.gmra.mxu0 %v422
        %v613 = vpop.f32.mrf.mxu0
        %v614 = vadd.f32 %v373, %v613
        %v615 = vpop.f32.mrf.mxu0
        %616 = vmatprep.mubr.f32.mxu0 0.0
        %617 = vmatmul.mubr.f32.gmra.mxu0 %v425
        %v618 = vpop.f32.mrf.mxu0
        %v619 = vadd.f32 %v373, %v618
        %v620 = vpop.f32.mrf.mxu0
        %621 = vmatprep.mubr.f32.mxu0 0.0
        %622 = vmatmul.mubr.f32.gmra.mxu0 %v428
        %v623 = vpop.f32.mrf.mxu0
        %v624 = vadd.f32 %v373, %v623
        %v625 = vpop.f32.mrf.mxu0
        %626 = vmatprep.mubr.f32.mxu0 0.0
        %627 = vmatmul.mubr.f32.gmra.mxu0 %v431
        %v628 = vpop.f32.mrf.mxu0
        %v629 = vadd.f32 %v373, %v628
        %v630 = vpop.f32.mrf.mxu0
        %631 = vmatprep.mubr.f32.mxu0 0.0
        %632 = vmatmul.mubr.f32.gmra.mxu0 %v434
        %v633 = vpop.f32.mrf.mxu0
        %v634 = vadd.f32 %v373, %v633
        %v635 = vpop.f32.mrf.mxu0
        %636 = vmatprep.mubr.f32.mxu0 0.0
        %637 = vmatmul.mubr.f32.gmra.mxu0 %v437
        %v638 = vpop.f32.mrf.mxu0
        %v639 = vadd.f32 %v373, %v638
        %v640 = vpop.f32.mrf.mxu0
        %641 = vmatprep.mubr.f32.mxu0 0.0
        %642 = vmatmul.mubr.f32.gmra.mxu0 %v440
        %v643 = vpop.f32.mrf.mxu0
        %v644 = vadd.f32 %v373, %v643
        %v645 = vpop.f32.mrf.mxu0
        %646 = vmatprep.mubr.f32.mxu0 0.0
        %647 = vmatmul.mubr.f32.gmra.mxu0 %v443
        %v648 = vpop.f32.mrf.mxu0
        %v649 = vadd.f32 %v373, %v648
        %v650 = vpop.f32.mrf.mxu0
        %651 = vmatprep.mubr.f32.mxu0 0.0
        %652 = vmatmul.mubr.f32.gmra.mxu0 %v446
        %v653 = vpop.f32.mrf.mxu0
        %v654 = vadd.f32 %v373, %v653
        %v655 = vpop.f32.mrf.mxu0
        %656 = vmatprep.mubr.f32.mxu0 0.0
        %657 = vmatmul.mubr.f32.gmra.mxu0 %v449
        %v658 = vpop.f32.mrf.mxu0
        %v659 = vadd.f32 %v373, %v658
        %v660 = vpop.f32.mrf.mxu0
        %661 = vmatprep.mubr.f32.mxu0 0.0
        %662 = vmatmul.mubr.f32.gmra.mxu0 %v452
        %v663 = vpop.f32.mrf.mxu0
        %v664 = vadd.f32 %v373, %v663
        %v665 = vpop.f32.mrf.mxu0
        %666 = vmatprep.mubr.f32.mxu0 0.0
        %667 = vmatmul.mubr.f32.gmra.mxu0 %v455
        %v668 = vpop.f32.mrf.mxu0
        %v669 = vadd.f32 %v373, %v668
        %v670 = vpop.f32.mrf.mxu0
        %671 = vmatprep.mubr.f32.mxu0 0.0
        %672 = vmatmul.mubr.f32.gmra.mxu0 %v458
        %v673 = vpop.f32.mrf.mxu0
        %v674 = vadd.f32 %v373, %v673
        %v675 = vpop.f32.mrf.mxu0
        %676 = vmatprep.mubr.f32.mxu0 0.0
        %677 = vmatmul.mubr.f32.gmra.mxu0 %v461
        %v678 = vpop.f32.mrf.mxu0
        %v679 = vadd.f32 %v373, %v678
        %v680 = vpop.f32.mrf.mxu0
        %681 = vmatprep.mubr.f32.mxu0 0.0
        %682 = vmatmul.mubr.f32.gmra.mxu0 %v464
        %v683 = vpop.f32.mrf.mxu0
        %v684 = vadd.f32 %v373, %v683
        %v685 = vpop.f32.mrf.mxu0
        %686 = vmatprep.mubr.f32.mxu0 0.0
        %687 = vmatmul.mubr.f32.gmra.mxu0 %v467
        %v688 = vpop.f32.mrf.mxu0
        %v689 = vadd.f32 %v373, %v688
        %v690 = vpop.f32.mrf.mxu0
        %691 = vmatprep.mubr.f32.mxu0 0.0
        %692 = vmatmul.mubr.f32.gmra.mxu0 %v470
        %v693 = vpop.f32.mrf.mxu0
        %v694 = vadd.f32 %v373, %v693
        %v695 = vpop.f32.mrf.mxu0
        %696 = vdwg.mxu0
        %vm697 = vcmp.gt.f32.partialorder %v539, 0.0
        %vm698 = vcmp.gt.f32.partialorder %v544, 0.0
        %vm699 = vcmp.gt.f32.partialorder %v549, 0.0
        %vm700 = vcmp.gt.f32.partialorder %v554, 0.0
        %vm701 = vcmp.gt.f32.partialorder %v559, 0.0
        %vm702 = vcmp.gt.f32.partialorder %v564, 0.0
        %vm703 = vcmp.gt.f32.partialorder %v569, 0.0
        %vm704 = vcmp.gt.f32.partialorder %v574, 0.0
        %vm705 = vcmp.gt.f32.partialorder %v579, 0.0
        %vm706 = vcmp.gt.f32.partialorder %v584, 0.0
        %vm707 = vcmp.gt.f32.partialorder %v589, 0.0
        %vm708 = vcmp.gt.f32.partialorder %v594, 0.0
        %vm709 = vcmp.gt.f32.partialorder %v599, 0.0
        %vm710 = vcmp.gt.f32.partialorder %v604, 0.0
        %vm711 = vcmp.gt.f32.partialorder %v609, 0.0
        %vm712 = vcmp.gt.f32.partialorder %v614, 0.0
        %vm713 = vcmp.gt.f32.partialorder %v619, 0.0
        %vm714 = vcmp.gt.f32.partialorder %v624, 0.0
        %vm715 = vcmp.gt.f32.partialorder %v629, 0.0
        %vm716 = vcmp.gt.f32.partialorder %v634, 0.0
        %vm717 = vcmp.gt.f32.partialorder %v639, 0.0
        %vm718 = vcmp.gt.f32.partialorder %v644, 0.0
        %vm719 = vcmp.gt.f32.partialorder %v649, 0.0
        %vm720 = vcmp.gt.f32.partialorder %v654, 0.0
        %vm721 = vcmp.gt.f32.partialorder %v659, 0.0
        %vm722 = vcmp.gt.f32.partialorder %v664, 0.0
        %vm723 = vcmp.gt.f32.partialorder %v669, 0.0
        %vm724 = vcmp.gt.f32.partialorder %v674, 0.0
        %vm725 = vcmp.gt.f32.partialorder %v679, 0.0
        %vm726 = vcmp.gt.f32.partialorder %v684, 0.0
        %vm727 = vcmp.gt.f32.partialorder %v689, 0.0
        %vm728 = vcmp.gt.f32.partialorder %v694, 0.0
        %v729 = vmul.f32 %v539, 0.01
        %v730 = vmul.f32 %v544, 0.01
        %v731 = vmul.f32 %v549, 0.01
        %v732 = vmul.f32 %v554, 0.01
        %v733 = vmul.f32 %v559, 0.01
        %v734 = vmul.f32 %v564, 0.01
        %v735 = vmul.f32 %v569, 0.01
        %v736 = vmul.f32 %v574, 0.01
        %v737 = vmul.f32 %v579, 0.01
        %v738 = vmul.f32 %v584, 0.01
        %v739 = vmul.f32 %v589, 0.01
        %v740 = vmul.f32 %v594, 0.01
        %v741 = vmul.f32 %v599, 0.01
        %v742 = vmul.f32 %v604, 0.01
        %v743 = vmul.f32 %v609, 0.01
        %v744 = vmul.f32 %v614, 0.01
        %v745 = vmul.f32 %v619, 0.01
        %v746 = vmul.f32 %v624, 0.01
        %v747 = vmul.f32 %v629, 0.01
        %v748 = vmul.f32 %v634, 0.01
        %v749 = vmul.f32 %v639, 0.01
        %v750 = vmul.f32 %v644, 0.01
        %v751 = vmul.f32 %v649, 0.01
        %v752 = vmul.f32 %v654, 0.01
        %v753 = vmul.f32 %v659, 0.01
        %v754 = vmul.f32 %v664, 0.01
        %v755 = vmul.f32 %v669, 0.01
        %v756 = vmul.f32 %v674, 0.01
        %v757 = vmul.f32 %v679, 0.01
        %v758 = vmul.f32 %v684, 0.01
        %v759 = vmul.f32 %v689, 0.01
        %v760 = vmul.f32 %v694, 0.01
        %v761 = vsel %vm697, %v539, %v729
        %v762 = vsel %vm698, %v544, %v730
        %v763 = vsel %vm699, %v549, %v731
        %v764 = vsel %vm700, %v554, %v732
        %v765 = vsel %vm701, %v559, %v733
        %v766 = vsel %vm702, %v564, %v734
        %v767 = vsel %vm703, %v569, %v735
        %v768 = vsel %vm704, %v574, %v736
        %v769 = vsel %vm705, %v579, %v737
        %v770 = vsel %vm706, %v584, %v738
        %v771 = vsel %vm707, %v589, %v739
        %v772 = vsel %vm708, %v594, %v740
        %v773 = vsel %vm709, %v599, %v741
        %v774 = vsel %vm710, %v604, %v742
        %v775 = vsel %vm711, %v609, %v743
        %v776 = vsel %vm712, %v614, %v744
        %v777 = vsel %vm713, %v619, %v745
        %v778 = vsel %vm714, %v624, %v746
        %v779 = vsel %vm715, %v629, %v747
        %v780 = vsel %vm716, %v634, %v748
        %v781 = vsel %vm717, %v639, %v749
        %v782 = vsel %vm718, %v644, %v750
        %v783 = vsel %vm719, %v649, %v751
        %v784 = vsel %vm720, %v654, %v752
        %v785 = vsel %vm721, %v659, %v753
        %v786 = vsel %vm722, %v664, %v754
        %v787 = vsel %vm723, %v669, %v755
        %v788 = vsel %vm724, %v674, %v756
        %v789 = vsel %vm725, %v679, %v757
        %v790 = vsel %vm726, %v684, %v758
        %v791 = vsel %vm727, %v689, %v759
        %v792 = vsel %vm728, %v694, %v760
        %v793 = vld [vmem:[%s3] sm:$0xff]
        %v794 = vld [vmem:[%s3 + $0x8] sm:$0xff]
        %v795 = vld [vmem:[%s3 + $0x10] sm:$0xff]
        %v796 = vld [vmem:[%s3 + $0x18] sm:$0xff]
        %v797 = vld [vmem:[%s3 + $0x20] sm:$0xff]
        %v798 = vld [vmem:[%s3 + $0x28] sm:$0xff]
        %v799 = vld [vmem:[%s3 + $0x30] sm:$0xff]
        %v800 = vld [vmem:[%s3 + $0x38] sm:$0xff]
        %v801 = vld [vmem:[%s3 + $0x40] sm:$0xff]
        %v802 = vld [vmem:[%s3 + $0x48] sm:$0xff]
        %v803 = vld [vmem:[%s3 + $0x50] sm:$0xff]
        %v804 = vld [vmem:[%s3 + $0x58] sm:$0xff]
        %v805 = vld [vmem:[%s3 + $0x60] sm:$0xff]
        %v806 = vld [vmem:[%s3 + $0x68] sm:$0xff]
        %v807 = vld [vmem:[%s3 + $0x70] sm:$0xff]
        %v808 = vld [vmem:[%s3 + $0x78] sm:$0xff]
        %v809 = vld [vmem:[%s4] sm:$0x1]
        %v811 = vlaneseq
        %v812 = vshrl.u32 %v811, 7
        %v813 = vsub.s32 0, %v812
        %v814 = vrot.slane %v809, %v813
        %816 = vmatprep.subr.mxu0 0.0
        %817 = vmatpush1.msra.mxu0 %v808
        %818 = vmatprep.subr.mxu0 0.0
        %819 = vmatpush1.msra.mxu0 %v807
        %820 = vmatprep.subr.mxu0 0.0
        %821 = vmatpush1.msra.mxu0 %v806
        %822 = vmatprep.subr.mxu0 0.0
        %823 = vmatpush1.msra.mxu0 %v805
        %824 = vmatprep.subr.mxu0 0.0
        %825 = vmatpush1.msra.mxu0 %v804
        %826 = vmatprep.subr.mxu0 0.0
        %827 = vmatpush1.msra.mxu0 %v803
        %828 = vmatprep.subr.mxu0 0.0
        %829 = vmatpush1.msra.mxu0 %v802
        %830 = vmatprep.subr.mxu0 0.0
        %831 = vmatpush1.msra.mxu0 %v801
        %832 = vmatprep.subr.mxu0 0.0
        %833 = vmatpush1.msra.mxu0 %v800
        %834 = vmatprep.subr.mxu0 0.0
        %835 = vmatpush1.msra.mxu0 %v799
        %836 = vmatprep.subr.mxu0 0.0
        %837 = vmatpush1.msra.mxu0 %v798
        %838 = vmatprep.subr.mxu0 0.0
        %839 = vmatpush1.msra.mxu0 %v797
        %840 = vmatprep.subr.mxu0 0.0
        %841 = vmatpush1.msra.mxu0 %v796
        %842 = vmatprep.subr.mxu0 0.0
        %843 = vmatpush1.msra.mxu0 %v795
        %844 = vmatprep.subr.mxu0 0.0
        %845 = vmatpush1.msra.mxu0 %v794
        %846 = vmatprep.subr.mxu0 0.0
        %847 = vmatpush1.msra.mxu0 %v793
        %848 = vmatprep.subr.mxu0 0.0
        %849 = vmatpush2.msra.mxu0 0.0
        %850 = vmatprep.subr.mxu0 0.0
        %851 = vmatpush2.msra.mxu0 0.0
        %852 = vmatprep.subr.mxu0 0.0
        %853 = vmatpush2.msra.mxu0 0.0
        %854 = vmatprep.subr.mxu0 0.0
        %855 = vmatpush2.msra.mxu0 0.0
        %856 = vmatprep.subr.mxu0 0.0
        %857 = vmatpush2.msra.mxu0 0.0
        %858 = vmatprep.subr.mxu0 0.0
        %859 = vmatpush2.msra.mxu0 0.0
        %860 = vmatprep.subr.mxu0 0.0
        %861 = vmatpush2.msra.mxu0 0.0
        %862 = vmatprep.subr.mxu0 0.0
        %863 = vmatpush2.msra.mxu0 0.0
        %864 = vmatprep.subr.mxu0 0.0
        %865 = vmatpush2.msra.mxu0 0.0
        %866 = vmatprep.subr.mxu0 0.0
        %867 = vmatpush2.msra.mxu0 0.0
        %868 = vmatprep.subr.mxu0 0.0
        %869 = vmatpush2.msra.mxu0 0.0
        %870 = vmatprep.subr.mxu0 0.0
        %871 = vmatpush2.msra.mxu0 0.0
        %872 = vmatprep.subr.mxu0 0.0
        %873 = vmatpush2.msra.mxu0 0.0
        %874 = vmatprep.subr.mxu0 0.0
        %875 = vmatpush2.msra.mxu0 0.0
        %876 = vmatprep.subr.mxu0 0.0
        %877 = vmatpush2.msra.mxu0 0.0
        %878 = vmatprep.subr.mxu0 0.0
        %879 = vmatpush2.msra.mxu0 0.0
        %880 = vmatprep.mubr.f32.mxu0 0.0
        %881 = vmatmul.mubr.f32.gmra.mxu0 %v761
        %v882 = vpop.f32.mrf.mxu0
        %v883 = vadd.f32 %v814, %v882
        %v884 = vpop.f32.mrf.mxu0
        %885 = vmatprep.mubr.f32.mxu0 0.0
        %886 = vmatmul.mubr.f32.gmra.mxu0 %v762
        %v887 = vpop.f32.mrf.mxu0
        %v888 = vadd.f32 %v814, %v887
        %v889 = vpop.f32.mrf.mxu0
        %890 = vmatprep.mubr.f32.mxu0 0.0
        %891 = vmatmul.mubr.f32.gmra.mxu0 %v763
        %v892 = vpop.f32.mrf.mxu0
        %v893 = vadd.f32 %v814, %v892
        %v894 = vpop.f32.mrf.mxu0
        %895 = vmatprep.mubr.f32.mxu0 0.0
        %896 = vmatmul.mubr.f32.gmra.mxu0 %v764
        %v897 = vpop.f32.mrf.mxu0
        %v898 = vadd.f32 %v814, %v897
        %v899 = vpop.f32.mrf.mxu0
        %900 = vmatprep.mubr.f32.mxu0 0.0
        %901 = vmatmul.mubr.f32.gmra.mxu0 %v765
        %v902 = vpop.f32.mrf.mxu0
        %v903 = vadd.f32 %v814, %v902
        %v904 = vpop.f32.mrf.mxu0
        %905 = vmatprep.mubr.f32.mxu0 0.0
        %906 = vmatmul.mubr.f32.gmra.mxu0 %v766
        %v907 = vpop.f32.mrf.mxu0
        %v908 = vadd.f32 %v814, %v907
        %v909 = vpop.f32.mrf.mxu0
        %910 = vmatprep.mubr.f32.mxu0 0.0
        %911 = vmatmul.mubr.f32.gmra.mxu0 %v767
        %v912 = vpop.f32.mrf.mxu0
        %v913 = vadd.f32 %v814, %v912
        %v914 = vpop.f32.mrf.mxu0
        %915 = vmatprep.mubr.f32.mxu0 0.0
        %916 = vmatmul.mubr.f32.gmra.mxu0 %v768
        %v917 = vpop.f32.mrf.mxu0
        %v918 = vadd.f32 %v814, %v917
        %v919 = vpop.f32.mrf.mxu0
        %920 = vmatprep.mubr.f32.mxu0 0.0
        %921 = vmatmul.mubr.f32.gmra.mxu0 %v769
        %v922 = vpop.f32.mrf.mxu0
        %v923 = vadd.f32 %v814, %v922
        %v924 = vpop.f32.mrf.mxu0
        %925 = vmatprep.mubr.f32.mxu0 0.0
        %926 = vmatmul.mubr.f32.gmra.mxu0 %v770
        %v927 = vpop.f32.mrf.mxu0
        %v928 = vadd.f32 %v814, %v927
        %v929 = vpop.f32.mrf.mxu0
        %930 = vmatprep.mubr.f32.mxu0 0.0
        %931 = vmatmul.mubr.f32.gmra.mxu0 %v771
        %v932 = vpop.f32.mrf.mxu0
        %v933 = vadd.f32 %v814, %v932
        %v934 = vpop.f32.mrf.mxu0
        %935 = vmatprep.mubr.f32.mxu0 0.0
        %936 = vmatmul.mubr.f32.gmra.mxu0 %v772
        %v937 = vpop.f32.mrf.mxu0
        %v938 = vadd.f32 %v814, %v937
        %v939 = vpop.f32.mrf.mxu0
        %940 = vmatprep.mubr.f32.mxu0 0.0
        %941 = vmatmul.mubr.f32.gmra.mxu0 %v773
        %v942 = vpop.f32.mrf.mxu0
        %v943 = vadd.f32 %v814, %v942
        %v944 = vpop.f32.mrf.mxu0
        %945 = vmatprep.mubr.f32.mxu0 0.0
        %946 = vmatmul.mubr.f32.gmra.mxu0 %v774
        %v947 = vpop.f32.mrf.mxu0
        %v948 = vadd.f32 %v814, %v947
        %v949 = vpop.f32.mrf.mxu0
        %950 = vmatprep.mubr.f32.mxu0 0.0
        %951 = vmatmul.mubr.f32.gmra.mxu0 %v775
        %v952 = vpop.f32.mrf.mxu0
        %v953 = vadd.f32 %v814, %v952
        %v954 = vpop.f32.mrf.mxu0
        %955 = vmatprep.mubr.f32.mxu0 0.0
        %956 = vmatmul.mubr.f32.gmra.mxu0 %v776
        %v957 = vpop.f32.mrf.mxu0
        %v958 = vadd.f32 %v814, %v957
        %v959 = vpop.f32.mrf.mxu0
        %960 = vmatprep.mubr.f32.mxu0 0.0
        %961 = vmatmul.mubr.f32.gmra.mxu0 %v777
        %v962 = vpop.f32.mrf.mxu0
        %v963 = vadd.f32 %v814, %v962
        %v964 = vpop.f32.mrf.mxu0
        %965 = vmatprep.mubr.f32.mxu0 0.0
        %966 = vmatmul.mubr.f32.gmra.mxu0 %v778
        %v967 = vpop.f32.mrf.mxu0
        %v968 = vadd.f32 %v814, %v967
        %v969 = vpop.f32.mrf.mxu0
        %970 = vmatprep.mubr.f32.mxu0 0.0
        %971 = vmatmul.mubr.f32.gmra.mxu0 %v779
        %v972 = vpop.f32.mrf.mxu0
        %v973 = vadd.f32 %v814, %v972
        %v974 = vpop.f32.mrf.mxu0
        %975 = vmatprep.mubr.f32.mxu0 0.0
        %976 = vmatmul.mubr.f32.gmra.mxu0 %v780
        %v977 = vpop.f32.mrf.mxu0
        %v978 = vadd.f32 %v814, %v977
        %v979 = vpop.f32.mrf.mxu0
        %980 = vmatprep.mubr.f32.mxu0 0.0
        %981 = vmatmul.mubr.f32.gmra.mxu0 %v781
        %v982 = vpop.f32.mrf.mxu0
        %v983 = vadd.f32 %v814, %v982
        %v984 = vpop.f32.mrf.mxu0
        %985 = vmatprep.mubr.f32.mxu0 0.0
        %986 = vmatmul.mubr.f32.gmra.mxu0 %v782
        %v987 = vpop.f32.mrf.mxu0
        %v988 = vadd.f32 %v814, %v987
        %v989 = vpop.f32.mrf.mxu0
        %990 = vmatprep.mubr.f32.mxu0 0.0
        %991 = vmatmul.mubr.f32.gmra.mxu0 %v783
        %v992 = vpop.f32.mrf.mxu0
        %v993 = vadd.f32 %v814, %v992
        %v994 = vpop.f32.mrf.mxu0
        %995 = vmatprep.mubr.f32.mxu0 0.0
        %996 = vmatmul.mubr.f32.gmra.mxu0 %v784
        %v997 = vpop.f32.mrf.mxu0
        %v998 = vadd.f32 %v814, %v997
        %v999 = vpop.f32.mrf.mxu0
        %1000 = vmatprep.mubr.f32.mxu0 0.0
        %1001 = vmatmul.mubr.f32.gmra.mxu0 %v785
        %v1002 = vpop.f32.mrf.mxu0
        %v1003 = vadd.f32 %v814, %v1002
        %v1004 = vpop.f32.mrf.mxu0
        %1005 = vmatprep.mubr.f32.mxu0 0.0
        %1006 = vmatmul.mubr.f32.gmra.mxu0 %v786
        %v1007 = vpop.f32.mrf.mxu0
        %v1008 = vadd.f32 %v814, %v1007
        %v1009 = vpop.f32.mrf.mxu0
        %1010 = vmatprep.mubr.f32.mxu0 0.0
        %1011 = vmatmul.mubr.f32.gmra.mxu0 %v787
        %v1012 = vpop.f32.mrf.mxu0
        %v1013 = vadd.f32 %v814, %v1012
        %v1014 = vpop.f32.mrf.mxu0
        %1015 = vmatprep.mubr.f32.mxu0 0.0
        %1016 = vmatmul.mubr.f32.gmra.mxu0 %v788
        %v1017 = vpop.f32.mrf.mxu0
        %v1018 = vadd.f32 %v814, %v1017
        %v1019 = vpop.f32.mrf.mxu0
        %1020 = vmatprep.mubr.f32.mxu0 0.0
        %1021 = vmatmul.mubr.f32.gmra.mxu0 %v789
        %v1022 = vpop.f32.mrf.mxu0
        %v1023 = vadd.f32 %v814, %v1022
        %v1024 = vpop.f32.mrf.mxu0
        %1025 = vmatprep.mubr.f32.mxu0 0.0
        %1026 = vmatmul.mubr.f32.gmra.mxu0 %v790
        %v1027 = vpop.f32.mrf.mxu0
        %v1028 = vadd.f32 %v814, %v1027
        %v1029 = vpop.f32.mrf.mxu0
        %1030 = vmatprep.mubr.f32.mxu0 0.0
        %1031 = vmatmul.mubr.f32.gmra.mxu0 %v791
        %v1032 = vpop.f32.mrf.mxu0
        %v1033 = vadd.f32 %v814, %v1032
        %v1034 = vpop.f32.mrf.mxu0
        %1035 = vmatprep.mubr.f32.mxu0 0.0
        %1036 = vmatmul.mubr.f32.gmra.mxu0 %v792
        %v1037 = vpop.f32.mrf.mxu0
        %v1038 = vadd.f32 %v814, %v1037
        %v1039 = vpop.f32.mrf.mxu0
        %1040 = vdwg.mxu0
        %vm1041 = vcmp.gt.f32.partialorder %v883, 0.0
        %vm1042 = vcmp.gt.f32.partialorder %v888, 0.0
        %vm1043 = vcmp.gt.f32.partialorder %v893, 0.0
        %vm1044 = vcmp.gt.f32.partialorder %v898, 0.0
        %vm1045 = vcmp.gt.f32.partialorder %v903, 0.0
        %vm1046 = vcmp.gt.f32.partialorder %v908, 0.0
        %vm1047 = vcmp.gt.f32.partialorder %v913, 0.0
        %vm1048 = vcmp.gt.f32.partialorder %v918, 0.0
        %vm1049 = vcmp.gt.f32.partialorder %v923, 0.0
        %vm1050 = vcmp.gt.f32.partialorder %v928, 0.0
        %vm1051 = vcmp.gt.f32.partialorder %v933, 0.0
        %vm1052 = vcmp.gt.f32.partialorder %v938, 0.0
        %vm1053 = vcmp.gt.f32.partialorder %v943, 0.0
        %vm1054 = vcmp.gt.f32.partialorder %v948, 0.0
        %vm1055 = vcmp.gt.f32.partialorder %v953, 0.0
        %vm1056 = vcmp.gt.f32.partialorder %v958, 0.0
        %vm1057 = vcmp.gt.f32.partialorder %v963, 0.0
        %vm1058 = vcmp.gt.f32.partialorder %v968, 0.0
        %vm1059 = vcmp.gt.f32.partialorder %v973, 0.0
        %vm1060 = vcmp.gt.f32.partialorder %v978, 0.0
        %vm1061 = vcmp.gt.f32.partialorder %v983, 0.0
        %vm1062 = vcmp.gt.f32.partialorder %v988, 0.0
        %vm1063 = vcmp.gt.f32.partialorder %v993, 0.0
        %vm1064 = vcmp.gt.f32.partialorder %v998, 0.0
        %vm1065 = vcmp.gt.f32.partialorder %v1003, 0.0
        %vm1066 = vcmp.gt.f32.partialorder %v1008, 0.0
        %vm1067 = vcmp.gt.f32.partialorder %v1013, 0.0
        %vm1068 = vcmp.gt.f32.partialorder %v1018, 0.0
        %vm1069 = vcmp.gt.f32.partialorder %v1023, 0.0
        %vm1070 = vcmp.gt.f32.partialorder %v1028, 0.0
        %vm1071 = vcmp.gt.f32.partialorder %v1033, 0.0
        %vm1072 = vcmp.gt.f32.partialorder %v1038, 0.0
        %v1073 = vmul.f32 %v883, 0.01
        %v1074 = vmul.f32 %v888, 0.01
        %v1075 = vmul.f32 %v893, 0.01
        %v1076 = vmul.f32 %v898, 0.01
        %v1077 = vmul.f32 %v903, 0.01
        %v1078 = vmul.f32 %v908, 0.01
        %v1079 = vmul.f32 %v913, 0.01
        %v1080 = vmul.f32 %v918, 0.01
        %v1081 = vmul.f32 %v923, 0.01
        %v1082 = vmul.f32 %v928, 0.01
        %v1083 = vmul.f32 %v933, 0.01
        %v1084 = vmul.f32 %v938, 0.01
        %v1085 = vmul.f32 %v943, 0.01
        %v1086 = vmul.f32 %v948, 0.01
        %v1087 = vmul.f32 %v953, 0.01
        %v1088 = vmul.f32 %v958, 0.01
        %v1089 = vmul.f32 %v963, 0.01
        %v1090 = vmul.f32 %v968, 0.01
        %v1091 = vmul.f32 %v973, 0.01
        %v1092 = vmul.f32 %v978, 0.01
        %v1093 = vmul.f32 %v983, 0.01
        %v1094 = vmul.f32 %v988, 0.01
        %v1095 = vmul.f32 %v993, 0.01
        %v1096 = vmul.f32 %v998, 0.01
        %v1097 = vmul.f32 %v1003, 0.01
        %v1098 = vmul.f32 %v1008, 0.01
        %v1099 = vmul.f32 %v1013, 0.01
        %v1100 = vmul.f32 %v1018, 0.01
        %v1101 = vmul.f32 %v1023, 0.01
        %v1102 = vmul.f32 %v1028, 0.01
        %v1103 = vmul.f32 %v1033, 0.01
        %v1104 = vmul.f32 %v1038, 0.01
        %v1105 = vsel %vm1041, %v883, %v1073
        %v1106 = vsel %vm1042, %v888, %v1074
        %v1107 = vsel %vm1043, %v893, %v1075
        %v1108 = vsel %vm1044, %v898, %v1076
        %v1109 = vsel %vm1045, %v903, %v1077
        %v1110 = vsel %vm1046, %v908, %v1078
        %v1111 = vsel %vm1047, %v913, %v1079
        %v1112 = vsel %vm1048, %v918, %v1080
        %v1113 = vsel %vm1049, %v923, %v1081
        %v1114 = vsel %vm1050, %v928, %v1082
        %v1115 = vsel %vm1051, %v933, %v1083
        %v1116 = vsel %vm1052, %v938, %v1084
        %v1117 = vsel %vm1053, %v943, %v1085
        %v1118 = vsel %vm1054, %v948, %v1086
        %v1119 = vsel %vm1055, %v953, %v1087
        %v1120 = vsel %vm1056, %v958, %v1088
        %v1121 = vsel %vm1057, %v963, %v1089
        %v1122 = vsel %vm1058, %v968, %v1090
        %v1123 = vsel %vm1059, %v973, %v1091
        %v1124 = vsel %vm1060, %v978, %v1092
        %v1125 = vsel %vm1061, %v983, %v1093
        %v1126 = vsel %vm1062, %v988, %v1094
        %v1127 = vsel %vm1063, %v993, %v1095
        %v1128 = vsel %vm1064, %v998, %v1096
        %v1129 = vsel %vm1065, %v1003, %v1097
        %v1130 = vsel %vm1066, %v1008, %v1098
        %v1131 = vsel %vm1067, %v1013, %v1099
        %v1132 = vsel %vm1068, %v1018, %v1100
        %v1133 = vsel %vm1069, %v1023, %v1101
        %v1134 = vsel %vm1070, %v1028, %v1102
        %v1135 = vsel %vm1071, %v1033, %v1103
        %v1136 = vsel %vm1072, %v1038, %v1104
        %v1137 = vld [vmem:[%s5] sm:$0xff]
        %v1138 = vld [vmem:[%s5 + $0x8] sm:$0xff]
        %v1139 = vld [vmem:[%s5 + $0x10] sm:$0xff]
        %v1140 = vld [vmem:[%s5 + $0x18] sm:$0xff]
        %v1141 = vld [vmem:[%s5 + $0x20] sm:$0xff]
        %v1142 = vld [vmem:[%s5 + $0x28] sm:$0xff]
        %v1143 = vld [vmem:[%s5 + $0x30] sm:$0xff]
        %v1144 = vld [vmem:[%s5 + $0x38] sm:$0xff]
        %v1145 = vld [vmem:[%s5 + $0x40] sm:$0xff]
        %v1146 = vld [vmem:[%s5 + $0x48] sm:$0xff]
        %v1147 = vld [vmem:[%s5 + $0x50] sm:$0xff]
        %v1148 = vld [vmem:[%s5 + $0x58] sm:$0xff]
        %v1149 = vld [vmem:[%s5 + $0x60] sm:$0xff]
        %v1150 = vld [vmem:[%s5 + $0x68] sm:$0xff]
        %v1151 = vld [vmem:[%s5 + $0x70] sm:$0xff]
        %v1152 = vld [vmem:[%s5 + $0x78] sm:$0xff]
        %v1153 = vld [vmem:[%s6] sm:$0x1]
        %v1155 = vlaneseq
        %v1156 = vshrl.u32 %v1155, 7
        %v1157 = vsub.s32 0, %v1156
        %v1158 = vrot.slane %v1153, %v1157
        %1160 = vmatprep.subr.mxu0 0.0
        %1161 = vmatpush1.msra.mxu0 %v1152
        %1162 = vmatprep.subr.mxu0 0.0
        %1163 = vmatpush1.msra.mxu0 %v1151
        %1164 = vmatprep.subr.mxu0 0.0
        %1165 = vmatpush1.msra.mxu0 %v1150
        %1166 = vmatprep.subr.mxu0 0.0
        %1167 = vmatpush1.msra.mxu0 %v1149
        %1168 = vmatprep.subr.mxu0 0.0
        %1169 = vmatpush1.msra.mxu0 %v1148
        %1170 = vmatprep.subr.mxu0 0.0
        %1171 = vmatpush1.msra.mxu0 %v1147
        %1172 = vmatprep.subr.mxu0 0.0
        %1173 = vmatpush1.msra.mxu0 %v1146
        %1174 = vmatprep.subr.mxu0 0.0
        %1175 = vmatpush1.msra.mxu0 %v1145
        %1176 = vmatprep.subr.mxu0 0.0
        %1177 = vmatpush1.msra.mxu0 %v1144
        %1178 = vmatprep.subr.mxu0 0.0
        %1179 = vmatpush1.msra.mxu0 %v1143
        %1180 = vmatprep.subr.mxu0 0.0
        %1181 = vmatpush1.msra.mxu0 %v1142
        %1182 = vmatprep.subr.mxu0 0.0
        %1183 = vmatpush1.msra.mxu0 %v1141
        %1184 = vmatprep.subr.mxu0 0.0
        %1185 = vmatpush1.msra.mxu0 %v1140
        %1186 = vmatprep.subr.mxu0 0.0
        %1187 = vmatpush1.msra.mxu0 %v1139
        %1188 = vmatprep.subr.mxu0 0.0
        %1189 = vmatpush1.msra.mxu0 %v1138
        %1190 = vmatprep.subr.mxu0 0.0
        %1191 = vmatpush1.msra.mxu0 %v1137
        %1192 = vmatprep.subr.mxu0 0.0
        %1193 = vmatpush2.msra.mxu0 0.0
        %1194 = vmatprep.subr.mxu0 0.0
        %1195 = vmatpush2.msra.mxu0 0.0
        %1196 = vmatprep.subr.mxu0 0.0
        %1197 = vmatpush2.msra.mxu0 0.0
        %1198 = vmatprep.subr.mxu0 0.0
        %1199 = vmatpush2.msra.mxu0 0.0
        %1200 = vmatprep.subr.mxu0 0.0
        %1201 = vmatpush2.msra.mxu0 0.0
        %1202 = vmatprep.subr.mxu0 0.0
        %1203 = vmatpush2.msra.mxu0 0.0
        %1204 = vmatprep.subr.mxu0 0.0
        %1205 = vmatpush2.msra.mxu0 0.0
        %1206 = vmatprep.subr.mxu0 0.0
        %1207 = vmatpush2.msra.mxu0 0.0
        %1208 = vmatprep.subr.mxu0 0.0
        %1209 = vmatpush2.msra.mxu0 0.0
        %1210 = vmatprep.subr.mxu0 0.0
        %1211 = vmatpush2.msra.mxu0 0.0
        %1212 = vmatprep.subr.mxu0 0.0
        %1213 = vmatpush2.msra.mxu0 0.0
        %1214 = vmatprep.subr.mxu0 0.0
        %1215 = vmatpush2.msra.mxu0 0.0
        %1216 = vmatprep.subr.mxu0 0.0
        %1217 = vmatpush2.msra.mxu0 0.0
        %1218 = vmatprep.subr.mxu0 0.0
        %1219 = vmatpush2.msra.mxu0 0.0
        %1220 = vmatprep.subr.mxu0 0.0
        %1221 = vmatpush2.msra.mxu0 0.0
        %1222 = vmatprep.subr.mxu0 0.0
        %1223 = vmatpush2.msra.mxu0 0.0
        %1224 = vmatprep.mubr.f32.mxu0 0.0
        %1225 = vmatmul.mubr.f32.gmra.mxu0 %v1105
        %v1226 = vpop.f32.mrf.mxu0
        %v1227 = vadd.f32 %v1158, %v1226
        %v1228 = vpop.f32.mrf.mxu0
        %1229 = vmatprep.mubr.f32.mxu0 0.0
        %1230 = vmatmul.mubr.f32.gmra.mxu0 %v1106
        %v1231 = vpop.f32.mrf.mxu0
        %v1232 = vadd.f32 %v1158, %v1231
        %v1233 = vpop.f32.mrf.mxu0
        %1234 = vmatprep.mubr.f32.mxu0 0.0
        %1235 = vmatmul.mubr.f32.gmra.mxu0 %v1107
        %v1236 = vpop.f32.mrf.mxu0
        %v1237 = vadd.f32 %v1158, %v1236
        %v1238 = vpop.f32.mrf.mxu0
        %1239 = vmatprep.mubr.f32.mxu0 0.0
        %1240 = vmatmul.mubr.f32.gmra.mxu0 %v1108
        %v1241 = vpop.f32.mrf.mxu0
        %v1242 = vadd.f32 %v1158, %v1241
        %v1243 = vpop.f32.mrf.mxu0
        %1244 = vmatprep.mubr.f32.mxu0 0.0
        %1245 = vmatmul.mubr.f32.gmra.mxu0 %v1109
        %v1246 = vpop.f32.mrf.mxu0
        %v1247 = vadd.f32 %v1158, %v1246
        %v1248 = vpop.f32.mrf.mxu0
        %1249 = vmatprep.mubr.f32.mxu0 0.0
        %1250 = vmatmul.mubr.f32.gmra.mxu0 %v1110
        %v1251 = vpop.f32.mrf.mxu0
        %v1252 = vadd.f32 %v1158, %v1251
        %v1253 = vpop.f32.mrf.mxu0
        %1254 = vmatprep.mubr.f32.mxu0 0.0
        %1255 = vmatmul.mubr.f32.gmra.mxu0 %v1111
        %v1256 = vpop.f32.mrf.mxu0
        %v1257 = vadd.f32 %v1158, %v1256
        %v1258 = vpop.f32.mrf.mxu0
        %1259 = vmatprep.mubr.f32.mxu0 0.0
        %1260 = vmatmul.mubr.f32.gmra.mxu0 %v1112
        %v1261 = vpop.f32.mrf.mxu0
        %v1262 = vadd.f32 %v1158, %v1261
        %v1263 = vpop.f32.mrf.mxu0
        %1264 = vmatprep.mubr.f32.mxu0 0.0
        %1265 = vmatmul.mubr.f32.gmra.mxu0 %v1113
        %v1266 = vpop.f32.mrf.mxu0
        %v1267 = vadd.f32 %v1158, %v1266
        %v1268 = vpop.f32.mrf.mxu0
        %1269 = vmatprep.mubr.f32.mxu0 0.0
        %1270 = vmatmul.mubr.f32.gmra.mxu0 %v1114
        %v1271 = vpop.f32.mrf.mxu0
        %v1272 = vadd.f32 %v1158, %v1271
        %v1273 = vpop.f32.mrf.mxu0
        %1274 = vmatprep.mubr.f32.mxu0 0.0
        %1275 = vmatmul.mubr.f32.gmra.mxu0 %v1115
        %v1276 = vpop.f32.mrf.mxu0
        %v1277 = vadd.f32 %v1158, %v1276
        %v1278 = vpop.f32.mrf.mxu0
        %1279 = vmatprep.mubr.f32.mxu0 0.0
        %1280 = vmatmul.mubr.f32.gmra.mxu0 %v1116
        %v1281 = vpop.f32.mrf.mxu0
        %v1282 = vadd.f32 %v1158, %v1281
        %v1283 = vpop.f32.mrf.mxu0
        %1284 = vmatprep.mubr.f32.mxu0 0.0
        %1285 = vmatmul.mubr.f32.gmra.mxu0 %v1117
        %v1286 = vpop.f32.mrf.mxu0
        %v1287 = vadd.f32 %v1158, %v1286
        %v1288 = vpop.f32.mrf.mxu0
        %1289 = vmatprep.mubr.f32.mxu0 0.0
        %1290 = vmatmul.mubr.f32.gmra.mxu0 %v1118
        %v1291 = vpop.f32.mrf.mxu0
        %v1292 = vadd.f32 %v1158, %v1291
        %v1293 = vpop.f32.mrf.mxu0
        %1294 = vmatprep.mubr.f32.mxu0 0.0
        %1295 = vmatmul.mubr.f32.gmra.mxu0 %v1119
        %v1296 = vpop.f32.mrf.mxu0
        %v1297 = vadd.f32 %v1158, %v1296
        %v1298 = vpop.f32.mrf.mxu0
        %1299 = vmatprep.mubr.f32.mxu0 0.0
        %1300 = vmatmul.mubr.f32.gmra.mxu0 %v1120
        %v1301 = vpop.f32.mrf.mxu0
        %v1302 = vadd.f32 %v1158, %v1301
        %v1303 = vpop.f32.mrf.mxu0
        %1304 = vmatprep.mubr.f32.mxu0 0.0
        %1305 = vmatmul.mubr.f32.gmra.mxu0 %v1121
        %v1306 = vpop.f32.mrf.mxu0
        %v1307 = vadd.f32 %v1158, %v1306
        %v1308 = vpop.f32.mrf.mxu0
        %1309 = vmatprep.mubr.f32.mxu0 0.0
        %1310 = vmatmul.mubr.f32.gmra.mxu0 %v1122
        %v1311 = vpop.f32.mrf.mxu0
        %v1312 = vadd.f32 %v1158, %v1311
        %v1313 = vpop.f32.mrf.mxu0
        %1314 = vmatprep.mubr.f32.mxu0 0.0
        %1315 = vmatmul.mubr.f32.gmra.mxu0 %v1123
        %v1316 = vpop.f32.mrf.mxu0
        %v1317 = vadd.f32 %v1158, %v1316
        %v1318 = vpop.f32.mrf.mxu0
        %1319 = vmatprep.mubr.f32.mxu0 0.0
        %1320 = vmatmul.mubr.f32.gmra.mxu0 %v1124
        %v1321 = vpop.f32.mrf.mxu0
        %v1322 = vadd.f32 %v1158, %v1321
        %v1323 = vpop.f32.mrf.mxu0
        %1324 = vmatprep.mubr.f32.mxu0 0.0
        %1325 = vmatmul.mubr.f32.gmra.mxu0 %v1125
        %v1326 = vpop.f32.mrf.mxu0
        %v1327 = vadd.f32 %v1158, %v1326
        %v1328 = vpop.f32.mrf.mxu0
        %1329 = vmatprep.mubr.f32.mxu0 0.0
        %1330 = vmatmul.mubr.f32.gmra.mxu0 %v1126
        %v1331 = vpop.f32.mrf.mxu0
        %v1332 = vadd.f32 %v1158, %v1331
        %v1333 = vpop.f32.mrf.mxu0
        %1334 = vmatprep.mubr.f32.mxu0 0.0
        %1335 = vmatmul.mubr.f32.gmra.mxu0 %v1127
        %v1336 = vpop.f32.mrf.mxu0
        %v1337 = vadd.f32 %v1158, %v1336
        %v1338 = vpop.f32.mrf.mxu0
        %1339 = vmatprep.mubr.f32.mxu0 0.0
        %1340 = vmatmul.mubr.f32.gmra.mxu0 %v1128
        %v1341 = vpop.f32.mrf.mxu0
        %v1342 = vadd.f32 %v1158, %v1341
        %v1343 = vpop.f32.mrf.mxu0
        %1344 = vmatprep.mubr.f32.mxu0 0.0
        %1345 = vmatmul.mubr.f32.gmra.mxu0 %v1129
        %v1346 = vpop.f32.mrf.mxu0
        %v1347 = vadd.f32 %v1158, %v1346
        %v1348 = vpop.f32.mrf.mxu0
        %1349 = vmatprep.mubr.f32.mxu0 0.0
        %1350 = vmatmul.mubr.f32.gmra.mxu0 %v1130
        %v1351 = vpop.f32.mrf.mxu0
        %v1352 = vadd.f32 %v1158, %v1351
        %v1353 = vpop.f32.mrf.mxu0
        %1354 = vmatprep.mubr.f32.mxu0 0.0
        %1355 = vmatmul.mubr.f32.gmra.mxu0 %v1131
        %v1356 = vpop.f32.mrf.mxu0
        %v1357 = vadd.f32 %v1158, %v1356
        %v1358 = vpop.f32.mrf.mxu0
        %1359 = vmatprep.mubr.f32.mxu0 0.0
        %1360 = vmatmul.mubr.f32.gmra.mxu0 %v1132
        %v1361 = vpop.f32.mrf.mxu0
        %v1362 = vadd.f32 %v1158, %v1361
        %v1363 = vpop.f32.mrf.mxu0
        %1364 = vmatprep.mubr.f32.mxu0 0.0
        %1365 = vmatmul.mubr.f32.gmra.mxu0 %v1133
        %v1366 = vpop.f32.mrf.mxu0
        %v1367 = vadd.f32 %v1158, %v1366
        %v1368 = vpop.f32.mrf.mxu0
        %1369 = vmatprep.mubr.f32.mxu0 0.0
        %1370 = vmatmul.mubr.f32.gmra.mxu0 %v1134
        %v1371 = vpop.f32.mrf.mxu0
        %v1372 = vadd.f32 %v1158, %v1371
        %v1373 = vpop.f32.mrf.mxu0
        %1374 = vmatprep.mubr.f32.mxu0 0.0
        %1375 = vmatmul.mubr.f32.gmra.mxu0 %v1135
        %v1376 = vpop.f32.mrf.mxu0
        %v1377 = vadd.f32 %v1158, %v1376
        %v1378 = vpop.f32.mrf.mxu0
        %1379 = vmatprep.mubr.f32.mxu0 0.0
        %1380 = vmatmul.mubr.f32.gmra.mxu0 %v1136
        %v1381 = vpop.f32.mrf.mxu0
        %v1382 = vadd.f32 %v1158, %v1381
        %v1383 = vpop.f32.mrf.mxu0
        %1384 = vdwg.mxu0
        %vm1385 = vcmp.gt.f32.partialorder %v1227, 0.0
        %vm1386 = vcmp.gt.f32.partialorder %v1232, 0.0
        %vm1387 = vcmp.gt.f32.partialorder %v1237, 0.0
        %vm1388 = vcmp.gt.f32.partialorder %v1242, 0.0
        %vm1389 = vcmp.gt.f32.partialorder %v1247, 0.0
        %vm1390 = vcmp.gt.f32.partialorder %v1252, 0.0
        %vm1391 = vcmp.gt.f32.partialorder %v1257, 0.0
        %vm1392 = vcmp.gt.f32.partialorder %v1262, 0.0
        %vm1393 = vcmp.gt.f32.partialorder %v1267, 0.0
        %vm1394 = vcmp.gt.f32.partialorder %v1272, 0.0
        %vm1395 = vcmp.gt.f32.partialorder %v1277, 0.0
        %vm1396 = vcmp.gt.f32.partialorder %v1282, 0.0
        %vm1397 = vcmp.gt.f32.partialorder %v1287, 0.0
        %vm1398 = vcmp.gt.f32.partialorder %v1292, 0.0
        %vm1399 = vcmp.gt.f32.partialorder %v1297, 0.0
        %vm1400 = vcmp.gt.f32.partialorder %v1302, 0.0
        %vm1401 = vcmp.gt.f32.partialorder %v1307, 0.0
        %vm1402 = vcmp.gt.f32.partialorder %v1312, 0.0
        %vm1403 = vcmp.gt.f32.partialorder %v1317, 0.0
        %vm1404 = vcmp.gt.f32.partialorder %v1322, 0.0
        %vm1405 = vcmp.gt.f32.partialorder %v1327, 0.0
        %vm1406 = vcmp.gt.f32.partialorder %v1332, 0.0
        %vm1407 = vcmp.gt.f32.partialorder %v1337, 0.0
        %vm1408 = vcmp.gt.f32.partialorder %v1342, 0.0
        %vm1409 = vcmp.gt.f32.partialorder %v1347, 0.0
        %vm1410 = vcmp.gt.f32.partialorder %v1352, 0.0
        %vm1411 = vcmp.gt.f32.partialorder %v1357, 0.0
        %vm1412 = vcmp.gt.f32.partialorder %v1362, 0.0
        %vm1413 = vcmp.gt.f32.partialorder %v1367, 0.0
        %vm1414 = vcmp.gt.f32.partialorder %v1372, 0.0
        %vm1415 = vcmp.gt.f32.partialorder %v1377, 0.0
        %vm1416 = vcmp.gt.f32.partialorder %v1382, 0.0
        %v1417 = vmul.f32 %v1227, 0.01
        %v1418 = vmul.f32 %v1232, 0.01
        %v1419 = vmul.f32 %v1237, 0.01
        %v1420 = vmul.f32 %v1242, 0.01
        %v1421 = vmul.f32 %v1247, 0.01
        %v1422 = vmul.f32 %v1252, 0.01
        %v1423 = vmul.f32 %v1257, 0.01
        %v1424 = vmul.f32 %v1262, 0.01
        %v1425 = vmul.f32 %v1267, 0.01
        %v1426 = vmul.f32 %v1272, 0.01
        %v1427 = vmul.f32 %v1277, 0.01
        %v1428 = vmul.f32 %v1282, 0.01
        %v1429 = vmul.f32 %v1287, 0.01
        %v1430 = vmul.f32 %v1292, 0.01
        %v1431 = vmul.f32 %v1297, 0.01
        %v1432 = vmul.f32 %v1302, 0.01
        %v1433 = vmul.f32 %v1307, 0.01
        %v1434 = vmul.f32 %v1312, 0.01
        %v1435 = vmul.f32 %v1317, 0.01
        %v1436 = vmul.f32 %v1322, 0.01
        %v1437 = vmul.f32 %v1327, 0.01
        %v1438 = vmul.f32 %v1332, 0.01
        %v1439 = vmul.f32 %v1337, 0.01
        %v1440 = vmul.f32 %v1342, 0.01
        %v1441 = vmul.f32 %v1347, 0.01
        %v1442 = vmul.f32 %v1352, 0.01
        %v1443 = vmul.f32 %v1357, 0.01
        %v1444 = vmul.f32 %v1362, 0.01
        %v1445 = vmul.f32 %v1367, 0.01
        %v1446 = vmul.f32 %v1372, 0.01
        %v1447 = vmul.f32 %v1377, 0.01
        %v1448 = vmul.f32 %v1382, 0.01
        %v1449 = vsel %vm1385, %v1227, %v1417
        %v1450 = vsel %vm1386, %v1232, %v1418
        %v1451 = vsel %vm1387, %v1237, %v1419
        %v1452 = vsel %vm1388, %v1242, %v1420
        %v1453 = vsel %vm1389, %v1247, %v1421
        %v1454 = vsel %vm1390, %v1252, %v1422
        %v1455 = vsel %vm1391, %v1257, %v1423
        %v1456 = vsel %vm1392, %v1262, %v1424
        %v1457 = vsel %vm1393, %v1267, %v1425
        %v1458 = vsel %vm1394, %v1272, %v1426
        %v1459 = vsel %vm1395, %v1277, %v1427
        %v1460 = vsel %vm1396, %v1282, %v1428
        %v1461 = vsel %vm1397, %v1287, %v1429
        %v1462 = vsel %vm1398, %v1292, %v1430
        %v1463 = vsel %vm1399, %v1297, %v1431
        %v1464 = vsel %vm1400, %v1302, %v1432
        %v1465 = vsel %vm1401, %v1307, %v1433
        %v1466 = vsel %vm1402, %v1312, %v1434
        %v1467 = vsel %vm1403, %v1317, %v1435
        %v1468 = vsel %vm1404, %v1322, %v1436
        %v1469 = vsel %vm1405, %v1327, %v1437
        %v1470 = vsel %vm1406, %v1332, %v1438
        %v1471 = vsel %vm1407, %v1337, %v1439
        %v1472 = vsel %vm1408, %v1342, %v1440
        %v1473 = vsel %vm1409, %v1347, %v1441
        %v1474 = vsel %vm1410, %v1352, %v1442
        %v1475 = vsel %vm1411, %v1357, %v1443
        %v1476 = vsel %vm1412, %v1362, %v1444
        %v1477 = vsel %vm1413, %v1367, %v1445
        %v1478 = vsel %vm1414, %v1372, %v1446
        %v1479 = vsel %vm1415, %v1377, %v1447
        %v1480 = vsel %vm1416, %v1382, %v1448
        %v1481 = vld [vmem:[%s7] sm:$0x1]
        %v1482 = vld [vmem:[#allocation2] sm:$0x1]
        %1484 = vset.pattern.permute.xlu0 0
        %1485 = vperm.xlu0 %1484, %v1482
        %v1486 = vpop.permute.xlu0 %1485
        %v1488 = vlaneseq
        %v1489 = vshrl.u32 %v1488, 7
        %v1490 = vsub.s32 0, %v1489
        %v1491 = vrot.slane %v1486, %v1490
        %1492 = vmatprep.subr.mxu0 0.0
        %1493 = vmatpush1.xpose.msra.mxu0 %v1464
        %1494 = vmatprep.subr.mxu0 0.0
        %1495 = vmatpush1.xpose.msra.mxu0 %v1463
        %1496 = vmatprep.subr.mxu0 0.0
        %1497 = vmatpush1.xpose.msra.mxu0 %v1462
        %1498 = vmatprep.subr.mxu0 0.0
        %1499 = vmatpush1.xpose.msra.mxu0 %v1461
        %1500 = vmatprep.subr.mxu0 0.0
        %1501 = vmatpush1.xpose.msra.mxu0 %v1460
        %1502 = vmatprep.subr.mxu0 0.0
        %1503 = vmatpush1.xpose.msra.mxu0 %v1459
        %1504 = vmatprep.subr.mxu0 0.0
        %1505 = vmatpush1.xpose.msra.mxu0 %v1458
        %1506 = vmatprep.subr.mxu0 0.0
        %1507 = vmatpush1.xpose.msra.mxu0 %v1457
        %1508 = vmatprep.subr.mxu0 0.0
        %1509 = vmatpush1.xpose.msra.mxu0 %v1456
        %1510 = vmatprep.subr.mxu0 0.0
        %1511 = vmatpush1.xpose.msra.mxu0 %v1455
        %1512 = vmatprep.subr.mxu0 0.0
        %1513 = vmatpush1.xpose.msra.mxu0 %v1454
        %1514 = vmatprep.subr.mxu0 0.0
        %1515 = vmatpush1.xpose.msra.mxu0 %v1453
        %1516 = vmatprep.subr.mxu0 0.0
        %1517 = vmatpush1.xpose.msra.mxu0 %v1452
        %1518 = vmatprep.subr.mxu0 0.0
        %1519 = vmatpush1.xpose.msra.mxu0 %v1451
        %1520 = vmatprep.subr.mxu0 0.0
        %1521 = vmatpush1.xpose.msra.mxu0 %v1450
        %1522 = vmatprep.subr.mxu0 0.0
        %1523 = vmatpush1.xpose.msra.mxu0 %v1449
        %1524 = vmatprep.subr.mxu0 0.0
        %1525 = vmatpush2.xpose.msra.mxu0 %v1480
        %1526 = vmatprep.subr.mxu0 0.0
        %1527 = vmatpush2.xpose.msra.mxu0 %v1479
        %1528 = vmatprep.subr.mxu0 0.0
        %1529 = vmatpush2.xpose.msra.mxu0 %v1478
        %1530 = vmatprep.subr.mxu0 0.0
        %1531 = vmatpush2.xpose.msra.mxu0 %v1477
        %1532 = vmatprep.subr.mxu0 0.0
        %1533 = vmatpush2.xpose.msra.mxu0 %v1476
        %1534 = vmatprep.subr.mxu0 0.0
        %1535 = vmatpush2.xpose.msra.mxu0 %v1475
        %1536 = vmatprep.subr.mxu0 0.0
        %1537 = vmatpush2.xpose.msra.mxu0 %v1474
        %1538 = vmatprep.subr.mxu0 0.0
        %1539 = vmatpush2.xpose.msra.mxu0 %v1473
        %1540 = vmatprep.subr.mxu0 0.0
        %1541 = vmatpush2.xpose.msra.mxu0 %v1472
        %1542 = vmatprep.subr.mxu0 0.0
        %1543 = vmatpush2.xpose.msra.mxu0 %v1471
        %1544 = vmatprep.subr.mxu0 0.0
        %1545 = vmatpush2.xpose.msra.mxu0 %v1470
        %1546 = vmatprep.subr.mxu0 0.0
        %1547 = vmatpush2.xpose.msra.mxu0 %v1469
        %1548 = vmatprep.subr.mxu0 0.0
        %1549 = vmatpush2.xpose.msra.mxu0 %v1468
        %1550 = vmatprep.subr.mxu0 0.0
        %1551 = vmatpush2.xpose.msra.mxu0 %v1467
        %1552 = vmatprep.subr.mxu0 0.0
        %1553 = vmatpush2.xpose.msra.mxu0 %v1466
        %1554 = vmatprep.subr.mxu0 0.0
        %1555 = vmatpush2.xpose.msra.mxu0 %v1465
        %1556 = vmatprep.mubr.f32.mxu0 0.0
        %1557 = vmatmul.mubr.f32.gmra.mxu0 %v1481
        %v1558 = vpop.f32.mrf.mxu0
        %v1559 = vadd.f32 %v1491, %v1558
        %v1560 = vpop.f32.mrf.mxu0
        %v1561 = vadd.f32 %v1491, %v1560
        %1562 = vdwg.mxu0
        %vm1563 = vcmp.gt.f32.partialorder %v1559, 0.0
        %vm1564 = vcmp.gt.f32.partialorder %v1561, 0.0
        %v1565 = vmul.f32 %v1559, 0.01
        %v1566 = vmul.f32 %v1561, 0.01
        %v1567 = vsel %vm1563, %v1559, %v1565
        %v1568 = vsel %vm1564, %v1561, %v1566
        %v1571 = vcombine.low %v1567, %v1568
        %v1573 = vunpack.c.l.s4 1966171168
        %v1574 = vunpack.c.0.s8 %v1573
        %v1575 = vlaneseq
        %v1576 = vshrl.u32 %v1575, 7
        %v1577 = vsub.s32 %v1574, %v1576
        %v1578 = vrot.slane %v1571, %v1577
        %v1580 = vunpack.c.l.s4 1966171168
        %v1581 = vunpack.c.0.s8 %v1580
        %v1582 = vlaneseq
        %v1583 = vshrl.u32 %v1582, 7
        %v1584 = vsub.s32 %v1581, %v1583
        %v1585 = vrot.slane %v1578, %v1584
        %v1587 = vlaneseq
        %vm1588 = vcmp.ge.s32.totalorder %v1587, 0
        %vm1589 = vcmp.lt.s32.totalorder %v1587, 256
        %vm1590 = vmand %vm1588, %vm1589
        %1591 = vst.msk [vmem:[%s328] sm:$0x3] %vm1590, %v1585
        %s1592 = sand.u32 %s227, 1
        %s1593 = scalar_lea.sflag [#allocation4], %s1592
        %s1594 = sand.u32 %s227, 1
        %s1595 = smul.addr %s1594, 2
        %s1596 = scalar_lea.vmem [#allocation3], %s1595
        // Predicated region
        $region57: #{tpu_custom_call.1} parent=55 // pred_check
          %p1597 = pneg %p237
        $region58: #{tpu_custom_call.1} parent=55 // pred_check_branch
          %1599 = sbr.rel (%p1597) target = $region60
        $region59: #{tpu_custom_call.1} parent=55 // pred_region
          %s1601 = ssub.s32 32, 32
          %1602 = vsyncadd %s1593, %s1601
          %s1603 = smul.addr %s25, 2
          %s1604 = smul.addr %s1603, 16
          %s1605 = scalar_lea.hbm %s9, %s1604
          %s1607 = sshll.u32 %s1596, 4
          %s1608 = int_to_ptr.vmem [resolvable:$true] %s1607
          %1610 = dma.vmem_to_hbm [thread:$0]  %s1608, 32, %s1605, %s1593
        $region60: #{tpu_custom_call.1} parent=55 // pred_fallthru
          _
      $region56: #{tpu_custom_call.1} parent=5 // pred_fallthru
        _
      %p1611 = scmp.le.s32.totalorder 2, %s20
      // Predicated region
      $region61: #{tpu_custom_call.1} parent=5 // pred_check
        %p1612 = pneg %p1611
      $region62: #{tpu_custom_call.1} parent=5 // pred_check_branch
        %1614 = sbr.rel (%p1612) target = $region64
      $region63: #{tpu_custom_call.1} parent=5 // pred_region
        %s1615 = ssub.s32 %s20, 2
        // Predicated region
        $region65: #{tpu_custom_call.1} parent=63 // pred_check
          %p1616 = pneg %p243
        $region66: #{tpu_custom_call.1} parent=63 // pred_check_branch
          %1618 = sbr.rel (%p1616) target = $region68
        $region67: #{tpu_custom_call.1} parent=63 // pred_region
          %s1619 = sand.u32 %s228, 1
          %s1620 = scalar_lea.sflag [#allocation4], %s1619
          %s1621 = sand.u32 %s228, 1
          %s1622 = smul.addr %s1621, 2
          %s1623 = scalar_lea.vmem [#allocation3], %s1622
          %1624 = dma.done %s1620, 32
        $region68: #{tpu_custom_call.1} parent=63 // pred_fallthru
          _
      $region64: #{tpu_custom_call.1} parent=5 // pred_fallthru
        _
    $region6: #{tpu_custom_call.1} parent=1 // loop_footer
      %s24 = sadd.s32 1, %s20
    $region7: #{tpu_custom_call.1} parent=1 // loop_footer_branch
      %19 = sbr.rel target = $region3
    $region8: #{tpu_custom_call.1} parent=1 // loop_exit
      _
    %1625 = vsyncpa [#allocation4], 1
    %s1626 = scalar_lea.sflag [#allocation4], 1
    %1627 = vsyncpa %s1626, 1

</llo_original>
